<compile_context>
chip_gen: v5e
topology: v5e:2x2
jax: 0.10.0
libtpu: 0.0.40
codegen_flags: <defaults>
</compile_context>

<pallas_src>
import jax
import jax.numpy as jnp
from jax.experimental import pallas as pl
from jax.experimental.pallas import tpu as pltpu


def _round_up(v, m):
    return ((v + m - 1) // m) * m


def highway_kernel(x_ref, w_ref, b_ref, o_ref):
    x = x_ref[...]                                    # [bm, e], streamed dtype (bf16)
    xf = x.astype(jnp.float32)                        # f32 copy for the combine

    # Fused matmul: [bm, e] @ [e, 2e] -> [bm, 2e]; bf16 operands, f32 accumulation.
    fused = jnp.dot(x.astype(jnp.bfloat16), w_ref[...],
                    preferred_element_type=jnp.float32)
    fused = fused + b_ref[...]                        # f32 bias add

    e_word = o_ref.shape[-1]
    proj = jnp.maximum(fused[:, :e_word], 0.0)        # relu branch (VPU)
    g = fused[:, e_word:]                             # gate pre-activation

    # sigmoid(g) = 1 / (1 + exp(-g)); exp + approx reciprocal both live in the
    # (otherwise idle) EUP slot, keeping the divide off the VALU.
    gate = pl.reciprocal(1.0 + jnp.exp(-g), approx=True)

    # Highway combine, rewritten: gate*proj + (1-gate)*x == x + gate*(proj - x).
    o_ref[...] = (xf + gate * (proj - xf)).astype(o_ref.dtype)


def prepare_highway_params(w_proj, b_proj, w_gate, b_gate, *, dot_dtype=jnp.bfloat16):
    """One-time weight prep (call once, outside the hot path).

    PyTorch Linear weights are (out, in); transpose and concatenate proj|gate
    along the output dim -> [e_word, 2*e_word] bf16 for the MXU. Biases stay
    f32 (added after f32 accumulation). No padding: the kernel keeps the full
    e_word as the lane dim, so no wrapper-side pad/slice HBM passes are needed.
    """
    w = jnp.concatenate(
        [w_proj.T.astype(dot_dtype), w_gate.T.astype(dot_dtype)], axis=1)
    b = jnp.concatenate(
        [b_proj.astype(jnp.float32), b_gate.astype(jnp.float32)]).reshape(1, -1)
    return w, b


def highway(x, fused_w, fused_b, *, block_rows=1024, out_dtype=None):
    """x: [N, e_word] (bf16 recommended); fused_w/fused_b from prepare_highway_params."""
    n_rows, e_word = x.shape
    assert fused_w.shape == (e_word, 2 * e_word)
    out_dtype = x.dtype if out_dtype is None else out_dtype

    # Row tile: multiple of 16 (bf16 sublane packing, also satisfies f32's 8).
    # Clamp to the array, then ensure >= 2 grid steps when there are enough rows
    # so the "parallel" axis can be split across v7x's two TensorCores.
    block_rows = min(block_rows, _round_up(n_rows, 16))
    if n_rows > 16 and block_rows >= n_rows:
        block_rows = _round_up(pl.cdiv(n_rows, 2), 16)
    grid = (pl.cdiv(n_rows, block_rows),)

    # VMEM budget (per the review, must stay under the 32 MiB scoped default,
    # esp. on v7x): 2x double-buffered x + out tiles at in/out itemsize, plus
    # the single-buffered weights/bias, plus the f32 [bm, 2e] fused intermediate.
    in_isz = jnp.dtype(x.dtype).itemsize
    out_isz = jnp.dtype(out_dtype).itemsize
    cost = pl.CostEstimate(
        flops=2 * n_rows * e_word * (2 * e_word) + 6 * n_rows * e_word,
        transcendentals=2 * n_rows * e_word,          # exp + reciprocal per gate elt
        bytes_accessed=(n_rows * e_word * in_isz                         # x in
                        + fused_w.size * jnp.dtype(fused_w.dtype).itemsize
                        + fused_b.size * 4
                        + n_rows * e_word * out_isz),                    # out
    )

    return pl.pallas_call(
        highway_kernel,
        out_shape=jax.ShapeDtypeStruct((n_rows, e_word), out_dtype),
        grid_spec=pltpu.PrefetchScalarGridSpec(
            num_scalar_prefetch=0,
            grid=grid,
            in_specs=[
                pl.BlockSpec((block_rows, e_word), lambda i: (i, 0)),      # x tile
                pl.BlockSpec((e_word, 2 * e_word), lambda i: (0, 0),
                             pipeline_mode=pl.Buffered(1)),                # [Wp^T|Wg^T]
                pl.BlockSpec((1, 2 * e_word), lambda i: (0, 0),
                             pipeline_mode=pl.Buffered(1)),                # [bp|bg]
            ],
            out_specs=pl.BlockSpec((block_rows, e_word), lambda i: (i, 0)),
        ),
        compiler_params=pltpu.CompilerParams(
            dimension_semantics=("parallel",),
            vmem_limit_bytes=32 << 20,
        ),
        cost_estimate=cost,
    )(x, fused_w, fused_b)


def highway_ref(x, w_proj, b_proj, w_gate, b_gate):
    """Pure-JAX f32 reference matching the PyTorch forward."""
    proj = jax.nn.relu(x @ w_proj.T + b_proj)
    gate = jax.nn.sigmoid(x @ w_gate.T + b_gate)
    return gate * proj + (1.0 - gate) * x


if __name__ == "__main__":
    key = jax.random.PRNGKey(0)
    e_word = 128        # word-embedding size (lane-dense)
    n_words = 1024      # all (sentence_len * batch) words flattened together

    k1, k2, k3, k4, k5 = jax.random.split(key, 5)
    x_f32 = jax.random.normal(k1, (n_words, e_word), dtype=jnp.float32)
    bound = 1.0 / float(jnp.sqrt(jnp.float32(e_word)))
    w_proj = jax.random.uniform(k2, (e_word, e_word), jnp.float32, -bound, bound)
    b_proj = jax.random.uniform(k3, (e_word,), jnp.float32, -bound, bound)
    w_gate = jax.random.uniform(k4, (e_word, e_word), jnp.float32, -bound, bound)
    b_gate = jax.random.uniform(k5, (e_word,), jnp.float32, -bound, bound)

    # One-time weight prep (fused + transposed + bf16); reused across calls.
    fused_w, fused_b = prepare_highway_params(w_proj, b_proj, w_gate, b_gate)

    # Stream activations as bf16 in HBM (the kernel is mem-bound; this halves
    # traffic). All math inside the kernel is f32-accumulated.
    x = x_f32.astype(jnp.bfloat16)

    out = highway(x, fused_w, fused_b, block_rows=1024)   # grid=2 -> both v7x TCs
    out = jax.block_until_ready(out)

    ref = highway_ref(x_f32, w_proj, b_proj, w_gate, b_gate)
    assert out.shape == (n_words, e_word)
    # bf16 activations + bf16 MXU operands + bf16 output vs f32 reference.
    assert jnp.allclose(out.astype(jnp.float32), ref, atol=8e-2, rtol=5e-2), (
        "mismatch vs reference, max abs err = "
        f"{float(jnp.max(jnp.abs(out.astype(jnp.float32) - ref)))}")

    print("KERNEL_OK")
</pallas_src>

<mosaic_0001>
module attributes {stable_mosaic.version = 11 : i64} {
  func.func @highway_kernel(%arg0: i32, %arg1: memref<512x128xbf16, #tpu.memory_space<vmem>>, %arg2: memref<128x256xbf16, #tpu.memory_space<vmem>>, %arg3: memref<1x256xf32, #tpu.memory_space<vmem>>, %arg4: memref<512x128xbf16, #tpu.memory_space<vmem>>) attributes {dimension_semantics = [#tpu.dimension_semantics<parallel>], iteration_bounds = array<i64: 2>, scalar_prefetch = 0 : i64, scratch_operands = 0 : i64, tpu.core_type = #tpu.core_type<tc>, window_params = [{transform_indices = @transform_0, window_bounds = array<i64: 512, 128>}, {pipeline_mode = #tpu.pipeline_mode<synchronous>, transform_indices = @transform_1, window_bounds = array<i64: 128, 256>}, {pipeline_mode = #tpu.pipeline_mode<synchronous>, transform_indices = @transform_2, window_bounds = array<i64: 1, 256>}, {transform_indices = @transform_3, window_bounds = array<i64: 512, 128>}]} {
    %c0 = arith.constant 0 : index
    %c0_0 = arith.constant 0 : index
    %0 = vector.load %arg1[%c0, %c0_0] : memref<512x128xbf16, #tpu.memory_space<vmem>>, vector<512x128xbf16>
    %1 = arith.extf %0 : vector<512x128xbf16> to vector<512x128xf32>
    %c0_1 = arith.constant 0 : index
    %c0_2 = arith.constant 0 : index
    %2 = vector.load %arg2[%c0_1, %c0_2] : memref<128x256xbf16, #tpu.memory_space<vmem>>, vector<128x256xbf16>
    %cst = arith.constant dense<0.000000e+00> : vector<512x256xf32>
    %3 = tpu.matmul %0, %2, %cst {dimension_numbers = #tpu.dot_dimension_numbers<[1], [0], [0], [1], [0, 0, 1, 1], [], []>} : vector<512x128xbf16>, vector<128x256xbf16>, vector<512x256xf32> -> vector<512x256xf32>
    %c0_3 = arith.constant 0 : index
    %c0_4 = arith.constant 0 : index
    %4 = vector.load %arg3[%c0_3, %c0_4] : memref<1x256xf32, #tpu.memory_space<vmem>>, vector<1x256xf32>
    %5 = vector.broadcast %4 : vector<1x256xf32> to vector<512x256xf32>
    %6 = arith.addf %3, %5 : vector<512x256xf32>
    %7 = vector.extract_strided_slice %6 {offsets = [0, 0], sizes = [512, 128], strides = [1, 1]} : vector<512x256xf32> to vector<512x128xf32>
    %cst_5 = arith.constant 0.000000e+00 : f32
    %8 = vector.broadcast %cst_5 : f32 to vector<512x128xf32>
    %9 = arith.maximumf %7, %8 : vector<512x128xf32>
    %10 = vector.extract_strided_slice %6 {offsets = [0, 128], sizes = [512, 128], strides = [1, 1]} : vector<512x256xf32> to vector<512x128xf32>
    %cst_6 = arith.constant 0.000000e+00 : f32
    %11 = vector.broadcast %cst_6 : f32 to vector<512x128xf32>
    %12 = arith.subf %11, %10 : vector<512x128xf32>
    %13 = math.exp %12 : vector<512x128xf32>
    %cst_7 = arith.constant 1.000000e+00 : f32
    %14 = vector.broadcast %cst_7 : f32 to vector<512x128xf32>
    %15 = arith.addf %14, %13 : vector<512x128xf32>
    %16 = tpu.reciprocal %15 {approx = true} : vector<512x128xf32> -> vector<512x128xf32>
    %17 = arith.subf %9, %1 : vector<512x128xf32>
    %18 = arith.mulf %16, %17 : vector<512x128xf32>
    %19 = arith.addf %1, %18 : vector<512x128xf32>
    %20 = arith.truncf %19 : vector<512x128xf32> to vector<512x128xbf16>
    %c0_8 = arith.constant 0 : index
    %c0_9 = arith.constant 0 : index
    %21 = vector.load %arg4[%c0_8, %c0_9] : memref<512x128xbf16, #tpu.memory_space<vmem>>, vector<512x128xbf16>
    tpu.vector_store %arg4[%c0_8, %c0_9], %20 {strides = array<i32>} : memref<512x128xbf16, #tpu.memory_space<vmem>>, vector<512x128xbf16>,
    return
  }
  func.func @transform_0(%arg0: i32) -> (i32, i32) {
    %c0_i32 = arith.constant 0 : i32
    %c0_i32_0 = arith.constant 0 : i32
    return %arg0, %c0_i32 : i32, i32
  }
  func.func @transform_1(%arg0: i32) -> (i32, i32) {
    %c0_i32 = arith.constant 0 : i32
    %c0_i32_0 = arith.constant 0 : i32
    %c0_i32_1 = arith.constant 0 : i32
    return %c0_i32, %c0_i32_0 : i32, i32
  }
  func.func @transform_2(%arg0: i32) -> (i32, i32) {
    %c0_i32 = arith.constant 0 : i32
    %c0_i32_0 = arith.constant 0 : i32
    %c0_i32_1 = arith.constant 0 : i32
    return %c0_i32, %c0_i32_0 : i32, i32
  }
  func.func @transform_3(%arg0: i32) -> (i32, i32) {
    %c0_i32 = arith.constant 0 : i32
    %c0_i32_0 = arith.constant 0 : i32
    return %arg0, %c0_i32 : i32, i32
  }
}

</mosaic_0001>

<llo_original>
// kernel: tpu_custom_call.1
$region0: #{tpu_custom_call.1}
  #allocation0 [shape = 'u32[]', space=smem, size = 0x4, offset = 0x4, fixed_abs, tag = 'smem constant byte address 0x4 - core index']
  #allocation1 [shape = 'u32[72,128]{1,0:T(1,128)}', space=vmem, size = 0x9000, scoped, tag = 'internal scratch']
  %s0 = inlined_call_operand.hbm [shape: bf16[1024,128], index: 0, kind: input, shape index: {}]
  %s1 = inlined_call_operand.hbm [shape: bf16[128,256], index: 1, kind: input, shape index: {}]
  %s2 = inlined_call_operand.hbm [shape: f32[1,256], index: 2, kind: input, shape index: {}]
  %s3 = inlined_call_operand.hbm [shape: bf16[1024,128], index: 3, kind: output, shape index: {}]
  %s4 = sld [smem:[#allocation0]]
  $region57: #{tpu_custom_call.1} parent=0
    _
  %s6 = ssub.s32 1, %s4
  %s7 = scalar_select 0, %s6, %s4
  $region1: #{tpu_custom_call.1} parent=0
    #allocation2 [shape = 'u8[262144]{0}', space=vmem, size = 0x40000, scoped, tag = 'input window, operand 0']
    #allocation3 [shape = 's32[2]{0}', space=sflag, size = 0x8, scoped, tag = 'scoped memory for tpu_custom_call.1']
    #allocation4 [shape = 's32[2]{0}', space=sflag, size = 0x8, scoped, tag = 'scoped memory for tpu_custom_call.1']
    #allocation5 [shape = 'u8[65536]{0}', space=vmem, size = 0x10000, scoped, tag = 'input window, operand 1, single buffered']
    #allocation6 [shape = 's32[1]{0}', space=sflag, size = 0x4, scoped, tag = 'scoped memory for tpu_custom_call.1']
    #allocation7 [shape = 'u8[1024]{0}', space=vmem, size = 0x400, scoped, tag = 'input window, operand 2, single buffered']
    #allocation8 [shape = 'u8[262144]{0}', space=vmem, size = 0x40000, scoped, tag = 'output window, operand 0']
    %8 = vsyncpa [#allocation3], 0
    %s9 = scalar_lea.sflag [#allocation3], 1
    %10 = vsyncpa %s9, 0
    %11 = vsyncpa [#allocation6], 0
    %12 = vsyncpa [#allocation4], 0
    %s13 = scalar_lea.sflag [#allocation4], 1
    %14 = vsyncpa %s13, 0
    loop: start=0, step=1, limit=4
    $region2: #{tpu_custom_call.1} parent=1 // loop_pre_header
      _
    $region3: #{tpu_custom_call.1} parent=1 // loop_header
      %s16 = sphi 0, %s20
      %p17 = scmp.ge.s32.totalorder %s16, 4
      %s26 = sphi 0, %s28
      %s29 = sphi 0, %s26
      %s30 = sphi 0, %s29
      %s46 = sphi 0, %s30
      %s50 = sphi 0, %s50
      %s52 = sphi 0, %s50
      %s53 = sphi 0, %s52
      %s67 = sphi 0, %s53
      %s71 = sphi 0, %s71
      %s73 = sphi 0, %s71
      %s74 = sphi 0, %s73
      %s88 = sphi 0, %s74
      %s94 = sphi 0, %s96
      %s97 = sphi 0, %s94
      %s98 = sphi 0, %s97
      %s114 = sphi 0, %s98
    $region4: #{tpu_custom_call.1} parent=1 // loop_header_branch
      %19 = sbr.rel (%p17) target = $region8
    $region5: #{tpu_custom_call.1} parent=1 // loop_body
      %s21 = ssub.s32 %s16, 1
      %s22 = ssub.s32 %s16, 2
      %s23 = sadd.s32 %s16, 1
      %s24 = ssub.s32 %s16, %s23
      %p25 = scmp.eq.s32.totalorder %s24, 0
      %s27 = sadd.s32 %s26, 1
      %s28 = scalar_select %p25, %s26, %s27
      %p31 = pneg %p25
      %p32 = scmp.eq.s32.totalorder %s16, 1
      %p33 = por %p31, %p32
      %p34 = scmp.ne.s32.totalorder %s26, %s29
      %p35 = scmp.eq.s32.totalorder %s16, 0
      %p36 = por %p34, %p35
      %p37 = scmp.ne.s32.totalorder %s26, %s29
      %p38 = scmp.eq.s32.totalorder %s21, 1
      %p39 = por %p37, %p38
      %p40 = scmp.ne.s32.totalorder %s29, %s30
      %p41 = scmp.eq.s32.totalorder %s21, 0
      %p42 = por %p40, %p41
      %p43 = scmp.ne.s32.totalorder %s29, %s30
      %p44 = scmp.eq.s32.totalorder %s22, 1
      %p45 = por %p43, %p44
      %p47 = scmp.ne.s32.totalorder %s30, %s46
      %p48 = scmp.eq.s32.totalorder %s22, 0
      %p49 = por %p47, %p48
      %s51 = sadd.s32 %s50, 1
      %p54 = scmp.eq.s32.totalorder %s16, 1
      %p55 = scmp.ne.s32.totalorder %s50, %s52
      %p56 = scmp.eq.s32.totalorder %s16, 0
      %p57 = por %p55, %p56
      %p58 = scmp.ne.s32.totalorder %s50, %s52
      %p59 = scmp.eq.s32.totalorder %s21, 1
      %p60 = por %p58, %p59
      %p61 = scmp.ne.s32.totalorder %s52, %s53
      %p62 = scmp.eq.s32.totalorder %s21, 0
      %p63 = por %p61, %p62
      %p64 = scmp.ne.s32.totalorder %s52, %s53
      %p65 = scmp.eq.s32.totalorder %s22, 1
      %p66 = por %p64, %p65
      %p68 = scmp.ne.s32.totalorder %s53, %s67
      %p69 = scmp.eq.s32.totalorder %s22, 0
      %p70 = por %p68, %p69
      %s72 = sadd.s32 %s71, 1
      %p75 = scmp.eq.s32.totalorder %s16, 1
      %p76 = scmp.ne.s32.totalorder %s71, %s73
      %p77 = scmp.eq.s32.totalorder %s16, 0
      %p78 = por %p76, %p77
      %p79 = scmp.ne.s32.totalorder %s71, %s73
      %p80 = scmp.eq.s32.totalorder %s21, 1
      %p81 = por %p79, %p80
      %p82 = scmp.ne.s32.totalorder %s73, %s74
      %p83 = scmp.eq.s32.totalorder %s21, 0
      %p84 = por %p82, %p83
      %p85 = scmp.ne.s32.totalorder %s73, %s74
      %p86 = scmp.eq.s32.totalorder %s22, 1
      %p87 = por %p85, %p86
      %p89 = scmp.ne.s32.totalorder %s74, %s88
      %p90 = scmp.eq.s32.totalorder %s22, 0
      %p91 = por %p89, %p90
      %s92 = ssub.s32 %s16, %s23
      %p93 = scmp.eq.s32.totalorder %s92, 0
      %s95 = sadd.s32 %s94, 1
      %s96 = scalar_select %p93, %s94, %s95
      %p99 = pneg %p93
      %p100 = scmp.eq.s32.totalorder %s16, 1
      %p101 = por %p99, %p100
      %p102 = scmp.ne.s32.totalorder %s94, %s97
      %p103 = scmp.eq.s32.totalorder %s16, 0
      %p104 = por %p102, %p103
      %p105 = scmp.ne.s32.totalorder %s94, %s97
      %p106 = scmp.eq.s32.totalorder %s21, 1
      %p107 = por %p105, %p106
      %p108 = scmp.ne.s32.totalorder %s97, %s98
      %p109 = scmp.eq.s32.totalorder %s21, 0
      %p110 = por %p108, %p109
      %p111 = scmp.ne.s32.totalorder %s97, %s98
      %p112 = scmp.eq.s32.totalorder %s22, 1
      %p113 = por %p111, %p112
      %p115 = scmp.ne.s32.totalorder %s98, %s114
      %p116 = scmp.eq.s32.totalorder %s22, 0
      %p117 = por %p115, %p116
      %p118 = scmp.le.s32.totalorder 1, %s16
      %p119 = scmp.lt.s32.totalorder %s16, 3
      %p120 = pnand %p118, %p119
      %p121 = pneg %p120
      // Predicated region
      $region9: #{tpu_custom_call.1} parent=5 // pred_check
        _
      $region10: #{tpu_custom_call.1} parent=5 // pred_check_branch
        %123 = sbr.rel (%p120) target = $region12
      $region11: #{tpu_custom_call.1} parent=5 // pred_region
        %s124 = ssub.s32 %s16, 1
        // Predicated region
        $region13: #{tpu_custom_call.1} parent=11 // pred_check
          %p125 = pneg %p63
        $region14: #{tpu_custom_call.1} parent=11 // pred_check_branch
          %127 = sbr.rel (%p125) target = $region16
        $region15: #{tpu_custom_call.1} parent=11 // pred_region
          %129 = vsyncadd [#allocation6], 0
          %s130 = sshll.u32 %s1, 4
          %s131 = int_to_ptr.hbm [resolvable:$true] %s130
          %s132 = sshll.u32 [#allocation5], 4
          %s133 = int_to_ptr.vmem [resolvable:$true] %s132
          %138 = dma.hbm_to_vmem [thread:$0]  %s131, 2048, %s133, [#allocation6], 128, 128, 8
        $region16: #{tpu_custom_call.1} parent=11 // pred_fallthru
          _
        // Predicated region
        $region17: #{tpu_custom_call.1} parent=11 // pred_check
          %p139 = pneg %p84
        $region18: #{tpu_custom_call.1} parent=11 // pred_check_branch
          %141 = sbr.rel (%p139) target = $region20
        $region19: #{tpu_custom_call.1} parent=11 // pred_region
          %143 = vsyncadd [#allocation6], 0
          %s145 = sshll.u32 %s2, 4
          %s146 = int_to_ptr.hbm [resolvable:$true] %s145
          %s147 = sshll.u32 [#allocation7], 4
          %s148 = int_to_ptr.vmem [resolvable:$true] %s147
          %150 = dma.hbm_to_vmem [thread:$0]  %s146, 32, %s148, [#allocation6]
        $region20: #{tpu_custom_call.1} parent=11 // pred_fallthru
          _
      $region12: #{tpu_custom_call.1} parent=5 // pred_fallthru
        _
      %p151 = scmp.lt.s32.totalorder %s16, 2
      // Predicated region
      $region21: #{tpu_custom_call.1} parent=5 // pred_check
        %p152 = pneg %p151
      $region22: #{tpu_custom_call.1} parent=5 // pred_check_branch
        %154 = sbr.rel (%p152) target = $region24
      $region23: #{tpu_custom_call.1} parent=5 // pred_region
        // Predicated region
        $region25: #{tpu_custom_call.1} parent=23 // pred_check
          %p155 = pneg %p36
        $region26: #{tpu_custom_call.1} parent=23 // pred_check_branch
          %157 = sbr.rel (%p155) target = $region28
        $region27: #{tpu_custom_call.1} parent=23 // pred_region
          %s158 = sand.u32 %s26, 1
          %s159 = scalar_lea.sflag [#allocation3], %s158
          %s160 = sand.u32 %s26, 1
          %s161 = smul.addr %s160, 256
          %s162 = scalar_lea.vmem [#allocation2], %s161
          %s163 = smul.u32 64, %s16
          %165 = vsyncadd %s159, 0
          %s166 = smul.addr %s163, 4
          %s167 = scalar_lea.hbm %s0, %s166
          %s168 = sshll.u32 %s167, 4
          %s169 = int_to_ptr.hbm [resolvable:$true] %s168
          %s170 = sshll.u32 %s162, 4
          %s171 = int_to_ptr.vmem [resolvable:$true] %s170
          %176 = dma.hbm_to_vmem [thread:$0]  %s169, 4096, %s171, %s159, 64, 64, 4
        $region28: #{tpu_custom_call.1} parent=23 // pred_fallthru
          _
      $region24: #{tpu_custom_call.1} parent=5 // pred_fallthru
        _
      %p177 = scmp.le.s32.totalorder 1, %s16
      %p178 = scmp.lt.s32.totalorder %s16, 3
      %p179 = pnand %p177, %p178
      %p180 = pneg %p179
      // Predicated region
      $region29: #{tpu_custom_call.1} parent=5 // pred_check
        _
      $region30: #{tpu_custom_call.1} parent=5 // pred_check_branch
        %182 = sbr.rel (%p179) target = $region32
      $region31: #{tpu_custom_call.1} parent=5 // pred_region
        %s183 = ssub.s32 %s16, 1
        %s184 = sand.u32 %s29, 1
        %s185 = scalar_lea.sflag [#allocation3], %s184
        %s186 = sand.u32 %s29, 1
        %s187 = smul.addr %s186, 256
        %s188 = scalar_lea.vmem [#allocation2], %s187
        // Predicated region
        $region33: #{tpu_custom_call.1} parent=31 // pred_check
          %p189 = pneg %p42
        $region34: #{tpu_custom_call.1} parent=31 // pred_check_branch
          %191 = sbr.rel (%p189) target = $region36
        $region35: #{tpu_custom_call.1} parent=31 // pred_region
          %193 = dma.done %s185, 4096
        $region36: #{tpu_custom_call.1} parent=31 // pred_fallthru
          _
        // Predicated region
        $region37: #{tpu_custom_call.1} parent=31 // pred_check
          %p194 = pneg %p63
        $region38: #{tpu_custom_call.1} parent=31 // pred_check_branch
          %196 = sbr.rel (%p194) target = $region40
        $region39: #{tpu_custom_call.1} parent=31 // pred_region
          %198 = dma.done [#allocation6], 2048
        $region40: #{tpu_custom_call.1} parent=31 // pred_fallthru
          _
        // Predicated region
        $region41: #{tpu_custom_call.1} parent=31 // pred_check
          %p199 = pneg %p84
        $region42: #{tpu_custom_call.1} parent=31 // pred_check_branch
          %201 = sbr.rel (%p199) target = $region44
        $region43: #{tpu_custom_call.1} parent=31 // pred_region
          %203 = dma.done [#allocation6], 32
        $region44: #{tpu_custom_call.1} parent=31 // pred_fallthru
          _
        %s204 = sand.u32 %s29, 1
        %s205 = scalar_lea.sflag [#allocation3], %s204
        %s206 = sand.u32 %s29, 1
        %s207 = smul.addr %s206, 256
        %s208 = scalar_lea.vmem [#allocation2], %s207
        %p209 = pneg %p42
        %p210 = pneg %p39
        %p211 = pneg %p63
        %p212 = pneg %p60
        %p213 = pneg %p84
        %p214 = pneg %p81
        %p215 = pneg %p110
        %p216 = pneg %p107
        %s217 = sand.u32 %s97, 1
        %s218 = scalar_lea.sflag [#allocation4], %s217
        %s219 = sand.u32 %s97, 1
        %s220 = smul.addr %s219, 256
        %s221 = scalar_lea.vmem [#allocation8], %s220
        %s222 = smul.u32 64, %s21
        %s223 = smul.u32 64, %s21
        %v224 = vld [vmem:[%s188] sm:$0xf]
        %v225 = vld [vmem:[%s188 + $0x4] sm:$0xf]
        %v226 = vld [vmem:[%s188 + $0x8] sm:$0xf]
        %v227 = vld [vmem:[%s188 + $0xc] sm:$0xf]
        %v228 = vld [vmem:[%s188 + $0x10] sm:$0xf]
        %v229 = vld [vmem:[%s188 + $0x14] sm:$0xf]
        %v230 = vld [vmem:[%s188 + $0x18] sm:$0xf]
        %v231 = vld [vmem:[%s188 + $0x1c] sm:$0xf]
        %v232 = vld [vmem:[%s188 + $0x20] sm:$0xf]
        %v233 = vld [vmem:[%s188 + $0x24] sm:$0xf]
        %v234 = vld [vmem:[%s188 + $0x28] sm:$0xf]
        %v235 = vld [vmem:[%s188 + $0x2c] sm:$0xf]
        %v236 = vld [vmem:[%s188 + $0x30] sm:$0xf]
        %v237 = vld [vmem:[%s188 + $0x34] sm:$0xf]
        %v238 = vld [vmem:[%s188 + $0x38] sm:$0xf]
        %v239 = vld [vmem:[%s188 + $0x3c] sm:$0xf]
        %v240 = vld [vmem:[%s188 + $0x40] sm:$0xf]
        %v241 = vld [vmem:[%s188 + $0x44] sm:$0xf]
        %v242 = vld [vmem:[%s188 + $0x48] sm:$0xf]
        %v243 = vld [vmem:[%s188 + $0x4c] sm:$0xf]
        %v244 = vld [vmem:[%s188 + $0x50] sm:$0xf]
        %v245 = vld [vmem:[%s188 + $0x54] sm:$0xf]
        %v246 = vld [vmem:[%s188 + $0x58] sm:$0xf]
        %v247 = vld [vmem:[%s188 + $0x5c] sm:$0xf]
        %v248 = vld [vmem:[%s188 + $0x60] sm:$0xf]
        %v249 = vld [vmem:[%s188 + $0x64] sm:$0xf]
        %v250 = vld [vmem:[%s188 + $0x68] sm:$0xf]
        %v251 = vld [vmem:[%s188 + $0x6c] sm:$0xf]
        %v252 = vld [vmem:[%s188 + $0x70] sm:$0xf]
        %v253 = vld [vmem:[%s188 + $0x74] sm:$0xf]
        %v254 = vld [vmem:[%s188 + $0x78] sm:$0xf]
        %v255 = vld [vmem:[%s188 + $0x7c] sm:$0xf]
        %v256 = vld [vmem:[%s188 + $0x80] sm:$0xf]
        %v257 = vld [vmem:[%s188 + $0x84] sm:$0xf]
        %v258 = vld [vmem:[%s188 + $0x88] sm:$0xf]
        %v259 = vld [vmem:[%s188 + $0x8c] sm:$0xf]
        %v260 = vld [vmem:[%s188 + $0x90] sm:$0xf]
        %v261 = vld [vmem:[%s188 + $0x94] sm:$0xf]
        %v262 = vld [vmem:[%s188 + $0x98] sm:$0xf]
        %v263 = vld [vmem:[%s188 + $0x9c] sm:$0xf]
        %v264 = vld [vmem:[%s188 + $0xa0] sm:$0xf]
        %v265 = vld [vmem:[%s188 + $0xa4] sm:$0xf]
        %v266 = vld [vmem:[%s188 + $0xa8] sm:$0xf]
        %v267 = vld [vmem:[%s188 + $0xac] sm:$0xf]
        %v268 = vld [vmem:[%s188 + $0xb0] sm:$0xf]
        %v269 = vld [vmem:[%s188 + $0xb4] sm:$0xf]
        %v270 = vld [vmem:[%s188 + $0xb8] sm:$0xf]
        %v271 = vld [vmem:[%s188 + $0xbc] sm:$0xf]
        %v272 = vld [vmem:[%s188 + $0xc0] sm:$0xf]
        %v273 = vld [vmem:[%s188 + $0xc4] sm:$0xf]
        %v274 = vld [vmem:[%s188 + $0xc8] sm:$0xf]
        %v275 = vld [vmem:[%s188 + $0xcc] sm:$0xf]
        %v276 = vld [vmem:[%s188 + $0xd0] sm:$0xf]
        %v277 = vld [vmem:[%s188 + $0xd4] sm:$0xf]
        %v278 = vld [vmem:[%s188 + $0xd8] sm:$0xf]
        %v279 = vld [vmem:[%s188 + $0xdc] sm:$0xf]
        %v280 = vld [vmem:[%s188 + $0xe0] sm:$0xf]
        %v281 = vld [vmem:[%s188 + $0xe4] sm:$0xf]
        %v282 = vld [vmem:[%s188 + $0xe8] sm:$0xf]
        %v283 = vld [vmem:[%s188 + $0xec] sm:$0xf]
        %v284 = vld [vmem:[%s188 + $0xf0] sm:$0xf]
        %v285 = vld [vmem:[%s188 + $0xf4] sm:$0xf]
        %v286 = vld [vmem:[%s188 + $0xf8] sm:$0xf]
        %v287 = vld [vmem:[%s188 + $0xfc] sm:$0xf]
        %v288 = vunpack.c.l.bf16 %v224
        %v289 = vunpack.c.l.bf16 %v225
        %v290 = vunpack.c.l.bf16 %v226
        %v291 = vunpack.c.l.bf16 %v227
        %v292 = vunpack.c.l.bf16 %v228
        %v293 = vunpack.c.l.bf16 %v229
        %v294 = vunpack.c.l.bf16 %v230
        %v295 = vunpack.c.l.bf16 %v231
        %v296 = vunpack.c.l.bf16 %v232
        %v297 = vunpack.c.l.bf16 %v233
        %v298 = vunpack.c.l.bf16 %v234
        %v299 = vunpack.c.l.bf16 %v235
        %v300 = vunpack.c.l.bf16 %v236
        %v301 = vunpack.c.l.bf16 %v237
        %v302 = vunpack.c.l.bf16 %v238
        %v303 = vunpack.c.l.bf16 %v239
        %v304 = vunpack.c.l.bf16 %v240
        %v305 = vunpack.c.l.bf16 %v241
        %v306 = vunpack.c.l.bf16 %v242
        %v307 = vunpack.c.l.bf16 %v243
        %v308 = vunpack.c.l.bf16 %v244
        %v309 = vunpack.c.l.bf16 %v245
        %v310 = vunpack.c.l.bf16 %v246
        %v311 = vunpack.c.l.bf16 %v247
        %v312 = vunpack.c.l.bf16 %v248
        %v313 = vunpack.c.l.bf16 %v249
        %v314 = vunpack.c.l.bf16 %v250
        %v315 = vunpack.c.l.bf16 %v251
        %v316 = vunpack.c.l.bf16 %v252
        %v317 = vunpack.c.l.bf16 %v253
        %v318 = vunpack.c.l.bf16 %v254
        %v319 = vunpack.c.l.bf16 %v255
        %v320 = vunpack.c.l.bf16 %v256
        %v321 = vunpack.c.l.bf16 %v257
        %v322 = vunpack.c.l.bf16 %v258
        %v323 = vunpack.c.l.bf16 %v259
        %v324 = vunpack.c.l.bf16 %v260
        %v325 = vunpack.c.l.bf16 %v261
        %v326 = vunpack.c.l.bf16 %v262
        %v327 = vunpack.c.l.bf16 %v263
        %v328 = vunpack.c.l.bf16 %v264
        %v329 = vunpack.c.l.bf16 %v265
        %v330 = vunpack.c.l.bf16 %v266
        %v331 = vunpack.c.l.bf16 %v267
        %v332 = vunpack.c.l.bf16 %v268
        %v333 = vunpack.c.l.bf16 %v269
        %v334 = vunpack.c.l.bf16 %v270
        %v335 = vunpack.c.l.bf16 %v271
        %v336 = vunpack.c.l.bf16 %v272
        %v337 = vunpack.c.l.bf16 %v273
        %v338 = vunpack.c.l.bf16 %v274
        %v339 = vunpack.c.l.bf16 %v275
        %v340 = vunpack.c.l.bf16 %v276
        %v341 = vunpack.c.l.bf16 %v277
        %v342 = vunpack.c.l.bf16 %v278
        %v343 = vunpack.c.l.bf16 %v279
        %v344 = vunpack.c.l.bf16 %v280
        %v345 = vunpack.c.l.bf16 %v281
        %v346 = vunpack.c.l.bf16 %v282
        %v347 = vunpack.c.l.bf16 %v283
        %v348 = vunpack.c.l.bf16 %v284
        %v349 = vunpack.c.l.bf16 %v285
        %v350 = vunpack.c.l.bf16 %v286
        %v351 = vunpack.c.l.bf16 %v287
        %v352 = vld [vmem:[#allocation5] sm:$0xff]
        %v353 = vld [vmem:[#allocation5 + $0x8] sm:$0xff]
        %v354 = vld [vmem:[#allocation5 + $0x10] sm:$0xff]
        %v355 = vld [vmem:[#allocation5 + $0x18] sm:$0xff]
        %v356 = vld [vmem:[#allocation5 + $0x20] sm:$0xff]
        %v357 = vld [vmem:[#allocation5 + $0x28] sm:$0xff]
        %v358 = vld [vmem:[#allocation5 + $0x30] sm:$0xff]
        %v359 = vld [vmem:[#allocation5 + $0x38] sm:$0xff]
        %v360 = vld [vmem:[#allocation5 + $0x40] sm:$0xff]
        %v361 = vld [vmem:[#allocation5 + $0x48] sm:$0xff]
        %v362 = vld [vmem:[#allocation5 + $0x50] sm:$0xff]
        %v363 = vld [vmem:[#allocation5 + $0x58] sm:$0xff]
        %v364 = vld [vmem:[#allocation5 + $0x60] sm:$0xff]
        %v365 = vld [vmem:[#allocation5 + $0x68] sm:$0xff]
        %v366 = vld [vmem:[#allocation5 + $0x70] sm:$0xff]
        %v367 = vld [vmem:[#allocation5 + $0x78] sm:$0xff]
        %v368 = vld [vmem:[#allocation7] sm:$0x3]
        %v370 = vperm.slane %v368, 0
        %v371 = vperm.slane %v368, 1
        %v438 = vunpack.c.l.b16 %v224
        %v439 = vunpack.c.l.b16 %v225
        %v440 = vunpack.c.l.b16 %v226
        %v441 = vunpack.c.l.b16 %v227
        %v442 = vunpack.c.l.b16 %v228
        %v443 = vunpack.c.l.b16 %v229
        %v444 = vunpack.c.l.b16 %v230
        %v445 = vunpack.c.l.b16 %v231
        %v446 = vunpack.c.l.b16 %v232
        %v447 = vunpack.c.l.b16 %v233
        %v448 = vunpack.c.l.b16 %v234
        %v449 = vunpack.c.l.b16 %v235
        %v450 = vunpack.c.l.b16 %v236
        %v451 = vunpack.c.l.b16 %v237
        %v452 = vunpack.c.l.b16 %v238
        %v453 = vunpack.c.l.b16 %v239
        %v454 = vunpack.c.l.b16 %v240
        %v455 = vunpack.c.l.b16 %v241
        %v456 = vunpack.c.l.b16 %v242
        %v457 = vunpack.c.l.b16 %v243
        %v458 = vunpack.c.l.b16 %v244
        %v459 = vunpack.c.l.b16 %v245
        %v460 = vunpack.c.l.b16 %v246
        %v461 = vunpack.c.l.b16 %v247
        %v462 = vunpack.c.l.b16 %v248
        %v463 = vunpack.c.l.b16 %v249
        %v464 = vunpack.c.l.b16 %v250
        %v465 = vunpack.c.l.b16 %v251
        %v466 = vunpack.c.l.b16 %v252
        %v467 = vunpack.c.l.b16 %v253
        %v468 = vunpack.c.l.b16 %v254
        %v469 = vunpack.c.l.b16 %v255
        %v470 = vunpack.c.l.b16 %v256
        %v471 = vunpack.c.l.b16 %v257
        %v472 = vunpack.c.l.b16 %v258
        %v473 = vunpack.c.l.b16 %v259
        %v474 = vunpack.c.l.b16 %v260
        %v475 = vunpack.c.l.b16 %v261
        %v476 = vunpack.c.l.b16 %v262
        %v477 = vunpack.c.l.b16 %v263
        %v478 = vunpack.c.l.b16 %v264
        %v479 = vunpack.c.l.b16 %v265
        %v480 = vunpack.c.l.b16 %v266
        %v481 = vunpack.c.l.b16 %v267
        %v482 = vunpack.c.l.b16 %v268
        %v483 = vunpack.c.l.b16 %v269
        %v484 = vunpack.c.l.b16 %v270
        %v485 = vunpack.c.l.b16 %v271
        %v486 = vunpack.c.l.b16 %v272
        %v487 = vunpack.c.l.b16 %v273
        %v488 = vunpack.c.l.b16 %v274
        %v489 = vunpack.c.l.b16 %v275
        %v490 = vunpack.c.l.b16 %v276
        %v491 = vunpack.c.l.b16 %v277
        %v492 = vunpack.c.l.b16 %v278
        %v493 = vunpack.c.l.b16 %v279
        %v494 = vunpack.c.l.b16 %v280
        %v495 = vunpack.c.l.b16 %v281
        %v496 = vunpack.c.l.b16 %v282
        %v497 = vunpack.c.l.b16 %v283
        %v498 = vunpack.c.l.b16 %v284
        %v499 = vunpack.c.l.b16 %v285
        %v500 = vunpack.c.l.b16 %v286
        %v501 = vunpack.c.l.b16 %v287
        %v502 = vpack.c.b16 %v439, %v438
        %v503 = vpack.c.b16 %v441, %v440
        %v504 = vpack.c.b16 %v443, %v442
        %v505 = vpack.c.b16 %v445, %v444
        %v506 = vpack.c.b16 %v447, %v446
        %v507 = vpack.c.b16 %v449, %v448
        %v508 = vpack.c.b16 %v451, %v450
        %v509 = vpack.c.b16 %v453, %v452
        %v510 = vpack.c.b16 %v455, %v454
        %v511 = vpack.c.b16 %v457, %v456
        %v512 = vpack.c.b16 %v459, %v458
        %v513 = vpack.c.b16 %v461, %v460
        %v514 = vpack.c.b16 %v463, %v462
        %v515 = vpack.c.b16 %v465, %v464
        %v516 = vpack.c.b16 %v467, %v466
        %v517 = vpack.c.b16 %v469, %v468
        %v518 = vpack.c.b16 %v471, %v470
        %v519 = vpack.c.b16 %v473, %v472
        %v520 = vpack.c.b16 %v475, %v474
        %v521 = vpack.c.b16 %v477, %v476
        %v522 = vpack.c.b16 %v479, %v478
        %v523 = vpack.c.b16 %v481, %v480
        %v524 = vpack.c.b16 %v483, %v482
        %v525 = vpack.c.b16 %v485, %v484
        %v526 = vpack.c.b16 %v487, %v486
        %v527 = vpack.c.b16 %v489, %v488
        %v528 = vpack.c.b16 %v491, %v490
        %v529 = vpack.c.b16 %v493, %v492
        %v530 = vpack.c.b16 %v495, %v494
        %v531 = vpack.c.b16 %v497, %v496
        %v532 = vpack.c.b16 %v499, %v498
        %v533 = vpack.c.b16 %v501, %v500
        %v582 = vunpack.c.l.b16 %v352
        %v583 = vunpack.c.h.b16 %v352
        %v584 = vunpack.c.l.b16 %v353
        %v585 = vunpack.c.h.b16 %v353
        %v586 = vunpack.c.l.b16 %v354
        %v587 = vunpack.c.h.b16 %v354
        %v588 = vunpack.c.l.b16 %v355
        %v589 = vunpack.c.h.b16 %v355
        %v590 = vunpack.c.l.b16 %v356
        %v591 = vunpack.c.h.b16 %v356
        %v592 = vunpack.c.l.b16 %v357
        %v593 = vunpack.c.h.b16 %v357
        %v594 = vunpack.c.l.b16 %v358
        %v595 = vunpack.c.h.b16 %v358
        %v596 = vunpack.c.l.b16 %v359
        %v597 = vunpack.c.h.b16 %v359
        %v598 = vunpack.c.l.b16 %v360
        %v599 = vunpack.c.h.b16 %v360
        %v600 = vunpack.c.l.b16 %v361
        %v601 = vunpack.c.h.b16 %v361
        %v602 = vunpack.c.l.b16 %v362
        %v603 = vunpack.c.h.b16 %v362
        %v604 = vunpack.c.l.b16 %v363
        %v605 = vunpack.c.h.b16 %v363
        %v606 = vunpack.c.l.b16 %v364
        %v607 = vunpack.c.h.b16 %v364
        %v608 = vunpack.c.l.b16 %v365
        %v609 = vunpack.c.h.b16 %v365
        %v610 = vunpack.c.l.b16 %v366
        %v611 = vunpack.c.h.b16 %v366
        %v612 = vunpack.c.l.b16 %v367
        %v613 = vunpack.c.h.b16 %v367
        %v614 = vpack.c.b16 %v584, %v582
        %v615 = vpack.c.b16 %v585, %v583
        %v616 = vpack.c.b16 %v588, %v586
        %v617 = vpack.c.b16 %v589, %v587
        %v618 = vpack.c.b16 %v592, %v590
        %v619 = vpack.c.b16 %v593, %v591
        %v620 = vpack.c.b16 %v596, %v594
        %v621 = vpack.c.b16 %v597, %v595
        %v622 = vpack.c.b16 %v600, %v598
        %v623 = vpack.c.b16 %v601, %v599
        %v624 = vpack.c.b16 %v604, %v602
        %v625 = vpack.c.b16 %v605, %v603
        %v626 = vpack.c.b16 %v608, %v606
        %v627 = vpack.c.b16 %v609, %v607
        %v628 = vpack.c.b16 %v612, %v610
        %v629 = vpack.c.b16 %v613, %v611
        %646 = vmatpush.bf16.msra.mxu0 %v628
        %647 = vmatpush.bf16.msra.mxu0 %v626
        %648 = vmatpush.bf16.msra.mxu0 %v624
        %649 = vmatpush.bf16.msra.mxu0 %v622
        %650 = vmatpush.bf16.msra.mxu0 %v620
        %651 = vmatpush.bf16.msra.mxu0 %v618
        %652 = vmatpush.bf16.msra.mxu0 %v616
        %653 = vmatpush.bf16.msra.mxu0 %v614
        %654 = vmatmul.bf16.gmra.mxu0 %v502
        %v655 = vpop.f32.mrf.mxu0
        %v656 = vadd.f32 %v370, %v655
        %v657 = vpop.f32.mrf.mxu0
        %v658 = vadd.f32 %v370, %v657
        %659 = vmatmul.bf16.gmra.mxu0 %v503
        %v660 = vpop.f32.mrf.mxu0
        %v661 = vadd.f32 %v370, %v660
        %v662 = vpop.f32.mrf.mxu0
        %v663 = vadd.f32 %v370, %v662
        %664 = vmatmul.bf16.gmra.mxu0 %v504
        %v665 = vpop.f32.mrf.mxu0
        %v666 = vadd.f32 %v370, %v665
        %v667 = vpop.f32.mrf.mxu0
        %v668 = vadd.f32 %v370, %v667
        %669 = vmatmul.bf16.gmra.mxu0 %v505
        %v670 = vpop.f32.mrf.mxu0
        %v671 = vadd.f32 %v370, %v670
        %v672 = vpop.f32.mrf.mxu0
        %v673 = vadd.f32 %v370, %v672
        %674 = vmatmul.bf16.gmra.mxu0 %v506
        %v675 = vpop.f32.mrf.mxu0
        %v676 = vadd.f32 %v370, %v675
        %v677 = vpop.f32.mrf.mxu0
        %v678 = vadd.f32 %v370, %v677
        %679 = vmatmul.bf16.gmra.mxu0 %v507
        %v680 = vpop.f32.mrf.mxu0
        %v681 = vadd.f32 %v370, %v680
        %v682 = vpop.f32.mrf.mxu0
        %v683 = vadd.f32 %v370, %v682
        %684 = vmatmul.bf16.gmra.mxu0 %v508
        %v685 = vpop.f32.mrf.mxu0
        %v686 = vadd.f32 %v370, %v685
        %v687 = vpop.f32.mrf.mxu0
        %v688 = vadd.f32 %v370, %v687
        %689 = vmatmul.bf16.gmra.mxu0 %v509
        %v690 = vpop.f32.mrf.mxu0
        %v691 = vadd.f32 %v370, %v690
        %v692 = vpop.f32.mrf.mxu0
        %v693 = vadd.f32 %v370, %v692
        %694 = vmatmul.bf16.gmra.mxu0 %v510
        %v695 = vpop.f32.mrf.mxu0
        %v696 = vadd.f32 %v370, %v695
        %v697 = vpop.f32.mrf.mxu0
        %v698 = vadd.f32 %v370, %v697
        %699 = vmatmul.bf16.gmra.mxu0 %v511
        %v700 = vpop.f32.mrf.mxu0
        %v701 = vadd.f32 %v370, %v700
        %v702 = vpop.f32.mrf.mxu0
        %v703 = vadd.f32 %v370, %v702
        %704 = vmatmul.bf16.gmra.mxu0 %v512
        %v705 = vpop.f32.mrf.mxu0
        %v706 = vadd.f32 %v370, %v705
        %v707 = vpop.f32.mrf.mxu0
        %v708 = vadd.f32 %v370, %v707
        %709 = vmatmul.bf16.gmra.mxu0 %v513
        %v710 = vpop.f32.mrf.mxu0
        %v711 = vadd.f32 %v370, %v710
        %v712 = vpop.f32.mrf.mxu0
        %v713 = vadd.f32 %v370, %v712
        %714 = vmatmul.bf16.gmra.mxu0 %v514
        %v715 = vpop.f32.mrf.mxu0
        %v716 = vadd.f32 %v370, %v715
        %v717 = vpop.f32.mrf.mxu0
        %v718 = vadd.f32 %v370, %v717
        %719 = vmatmul.bf16.gmra.mxu0 %v515
        %v720 = vpop.f32.mrf.mxu0
        %v721 = vadd.f32 %v370, %v720
        %v722 = vpop.f32.mrf.mxu0
        %v723 = vadd.f32 %v370, %v722
        %724 = vmatmul.bf16.gmra.mxu0 %v516
        %v725 = vpop.f32.mrf.mxu0
        %v726 = vadd.f32 %v370, %v725
        %v727 = vpop.f32.mrf.mxu0
        %v728 = vadd.f32 %v370, %v727
        %729 = vmatmul.bf16.gmra.mxu0 %v517
        %v730 = vpop.f32.mrf.mxu0
        %v731 = vadd.f32 %v370, %v730
        %v732 = vpop.f32.mrf.mxu0
        %v733 = vadd.f32 %v370, %v732
        %734 = vmatmul.bf16.gmra.mxu0 %v518
        %v735 = vpop.f32.mrf.mxu0
        %v736 = vadd.f32 %v370, %v735
        %v737 = vpop.f32.mrf.mxu0
        %v738 = vadd.f32 %v370, %v737
        %739 = vmatmul.bf16.gmra.mxu0 %v519
        %v740 = vpop.f32.mrf.mxu0
        %v741 = vadd.f32 %v370, %v740
        %v742 = vpop.f32.mrf.mxu0
        %v743 = vadd.f32 %v370, %v742
        %744 = vmatmul.bf16.gmra.mxu0 %v520
        %v745 = vpop.f32.mrf.mxu0
        %v746 = vadd.f32 %v370, %v745
        %v747 = vpop.f32.mrf.mxu0
        %v748 = vadd.f32 %v370, %v747
        %749 = vmatmul.bf16.gmra.mxu0 %v521
        %v750 = vpop.f32.mrf.mxu0
        %v751 = vadd.f32 %v370, %v750
        %v752 = vpop.f32.mrf.mxu0
        %v753 = vadd.f32 %v370, %v752
        %754 = vmatmul.bf16.gmra.mxu0 %v522
        %v755 = vpop.f32.mrf.mxu0
        %v756 = vadd.f32 %v370, %v755
        %v757 = vpop.f32.mrf.mxu0
        %v758 = vadd.f32 %v370, %v757
        %759 = vmatmul.bf16.gmra.mxu0 %v523
        %v760 = vpop.f32.mrf.mxu0
        %v761 = vadd.f32 %v370, %v760
        %v762 = vpop.f32.mrf.mxu0
        %v763 = vadd.f32 %v370, %v762
        %764 = vmatmul.bf16.gmra.mxu0 %v524
        %v765 = vpop.f32.mrf.mxu0
        %v766 = vadd.f32 %v370, %v765
        %v767 = vpop.f32.mrf.mxu0
        %v768 = vadd.f32 %v370, %v767
        %769 = vmatmul.bf16.gmra.mxu0 %v525
        %v770 = vpop.f32.mrf.mxu0
        %v771 = vadd.f32 %v370, %v770
        %v772 = vpop.f32.mrf.mxu0
        %v773 = vadd.f32 %v370, %v772
        %774 = vmatmul.bf16.gmra.mxu0 %v526
        %v775 = vpop.f32.mrf.mxu0
        %v776 = vadd.f32 %v370, %v775
        %v777 = vpop.f32.mrf.mxu0
        %v778 = vadd.f32 %v370, %v777
        %779 = vmatmul.bf16.gmra.mxu0 %v527
        %v780 = vpop.f32.mrf.mxu0
        %v781 = vadd.f32 %v370, %v780
        %v782 = vpop.f32.mrf.mxu0
        %v783 = vadd.f32 %v370, %v782
        %784 = vmatmul.bf16.gmra.mxu0 %v528
        %v785 = vpop.f32.mrf.mxu0
        %v786 = vadd.f32 %v370, %v785
        %v787 = vpop.f32.mrf.mxu0
        %v788 = vadd.f32 %v370, %v787
        %789 = vmatmul.bf16.gmra.mxu0 %v529
        %v790 = vpop.f32.mrf.mxu0
        %v791 = vadd.f32 %v370, %v790
        %v792 = vpop.f32.mrf.mxu0
        %v793 = vadd.f32 %v370, %v792
        %794 = vmatmul.bf16.gmra.mxu0 %v530
        %v795 = vpop.f32.mrf.mxu0
        %v796 = vadd.f32 %v370, %v795
        %v797 = vpop.f32.mrf.mxu0
        %v798 = vadd.f32 %v370, %v797
        %799 = vmatmul.bf16.gmra.mxu0 %v531
        %v800 = vpop.f32.mrf.mxu0
        %v801 = vadd.f32 %v370, %v800
        %v802 = vpop.f32.mrf.mxu0
        %v803 = vadd.f32 %v370, %v802
        %804 = vmatmul.bf16.gmra.mxu0 %v532
        %v805 = vpop.f32.mrf.mxu0
        %v806 = vadd.f32 %v370, %v805
        %v807 = vpop.f32.mrf.mxu0
        %v808 = vadd.f32 %v370, %v807
        %809 = vmatmul.bf16.gmra.mxu0 %v533
        %v810 = vpop.f32.mrf.mxu0
        %v811 = vadd.f32 %v370, %v810
        %v812 = vpop.f32.mrf.mxu0
        %v813 = vadd.f32 %v370, %v812
        %814 = vdwg.mxu0
        %815 = vmatpush.bf16.msra.mxu0 %v629
        %816 = vmatpush.bf16.msra.mxu0 %v627
        %817 = vmatpush.bf16.msra.mxu0 %v625
        %818 = vmatpush.bf16.msra.mxu0 %v623
        %819 = vmatpush.bf16.msra.mxu0 %v621
        %820 = vmatpush.bf16.msra.mxu0 %v619
        %821 = vmatpush.bf16.msra.mxu0 %v617
        %822 = vmatpush.bf16.msra.mxu0 %v615
        %823 = vmatmul.bf16.gmra.mxu0 %v502
        %v824 = vpop.f32.mrf.mxu0
        %v825 = vadd.f32 %v371, %v824
        %v826 = vpop.f32.mrf.mxu0
        %v827 = vadd.f32 %v371, %v826
        %828 = vmatmul.bf16.gmra.mxu0 %v503
        %v829 = vpop.f32.mrf.mxu0
        %v830 = vadd.f32 %v371, %v829
        %v831 = vpop.f32.mrf.mxu0
        %v832 = vadd.f32 %v371, %v831
        %833 = vmatmul.bf16.gmra.mxu0 %v504
        %v834 = vpop.f32.mrf.mxu0
        %v835 = vadd.f32 %v371, %v834
        %v836 = vpop.f32.mrf.mxu0
        %v837 = vadd.f32 %v371, %v836
        %838 = vmatmul.bf16.gmra.mxu0 %v505
        %v839 = vpop.f32.mrf.mxu0
        %v840 = vadd.f32 %v371, %v839
        %v841 = vpop.f32.mrf.mxu0
        %v842 = vadd.f32 %v371, %v841
        %843 = vmatmul.bf16.gmra.mxu0 %v506
        %v844 = vpop.f32.mrf.mxu0
        %v845 = vadd.f32 %v371, %v844
        %v846 = vpop.f32.mrf.mxu0
        %v847 = vadd.f32 %v371, %v846
        %848 = vmatmul.bf16.gmra.mxu0 %v507
        %v849 = vpop.f32.mrf.mxu0
        %v850 = vadd.f32 %v371, %v849
        %v851 = vpop.f32.mrf.mxu0
        %v852 = vadd.f32 %v371, %v851
        %853 = vmatmul.bf16.gmra.mxu0 %v508
        %v854 = vpop.f32.mrf.mxu0
        %v855 = vadd.f32 %v371, %v854
        %v856 = vpop.f32.mrf.mxu0
        %v857 = vadd.f32 %v371, %v856
        %858 = vmatmul.bf16.gmra.mxu0 %v509
        %v859 = vpop.f32.mrf.mxu0
        %v860 = vadd.f32 %v371, %v859
        %v861 = vpop.f32.mrf.mxu0
        %v862 = vadd.f32 %v371, %v861
        %863 = vmatmul.bf16.gmra.mxu0 %v510
        %v864 = vpop.f32.mrf.mxu0
        %v865 = vadd.f32 %v371, %v864
        %v866 = vpop.f32.mrf.mxu0
        %v867 = vadd.f32 %v371, %v866
        %868 = vmatmul.bf16.gmra.mxu0 %v511
        %v869 = vpop.f32.mrf.mxu0
        %v870 = vadd.f32 %v371, %v869
        %v871 = vpop.f32.mrf.mxu0
        %v872 = vadd.f32 %v371, %v871
        %873 = vmatmul.bf16.gmra.mxu0 %v512
        %v874 = vpop.f32.mrf.mxu0
        %v875 = vadd.f32 %v371, %v874
        %v876 = vpop.f32.mrf.mxu0
        %v877 = vadd.f32 %v371, %v876
        %878 = vmatmul.bf16.gmra.mxu0 %v513
        %v879 = vpop.f32.mrf.mxu0
        %v880 = vadd.f32 %v371, %v879
        %v881 = vpop.f32.mrf.mxu0
        %v882 = vadd.f32 %v371, %v881
        %883 = vmatmul.bf16.gmra.mxu0 %v514
        %v884 = vpop.f32.mrf.mxu0
        %v885 = vadd.f32 %v371, %v884
        %v886 = vpop.f32.mrf.mxu0
        %v887 = vadd.f32 %v371, %v886
        %888 = vmatmul.bf16.gmra.mxu0 %v515
        %v889 = vpop.f32.mrf.mxu0
        %v890 = vadd.f32 %v371, %v889
        %v891 = vpop.f32.mrf.mxu0
        %v892 = vadd.f32 %v371, %v891
        %893 = vmatmul.bf16.gmra.mxu0 %v516
        %v894 = vpop.f32.mrf.mxu0
        %v895 = vadd.f32 %v371, %v894
        %v896 = vpop.f32.mrf.mxu0
        %v897 = vadd.f32 %v371, %v896
        %898 = vmatmul.bf16.gmra.mxu0 %v517
        %v899 = vpop.f32.mrf.mxu0
        %v900 = vadd.f32 %v371, %v899
        %v901 = vpop.f32.mrf.mxu0
        %v902 = vadd.f32 %v371, %v901
        %903 = vmatmul.bf16.gmra.mxu0 %v518
        %v904 = vpop.f32.mrf.mxu0
        %v905 = vadd.f32 %v371, %v904
        %v906 = vpop.f32.mrf.mxu0
        %v907 = vadd.f32 %v371, %v906
        %908 = vmatmul.bf16.gmra.mxu0 %v519
        %v909 = vpop.f32.mrf.mxu0
        %v910 = vadd.f32 %v371, %v909
        %v911 = vpop.f32.mrf.mxu0
        %v912 = vadd.f32 %v371, %v911
        %913 = vmatmul.bf16.gmra.mxu0 %v520
        %v914 = vpop.f32.mrf.mxu0
        %v915 = vadd.f32 %v371, %v914
        %v916 = vpop.f32.mrf.mxu0
        %v917 = vadd.f32 %v371, %v916
        %918 = vmatmul.bf16.gmra.mxu0 %v521
        %v919 = vpop.f32.mrf.mxu0
        %v920 = vadd.f32 %v371, %v919
        %v921 = vpop.f32.mrf.mxu0
        %v922 = vadd.f32 %v371, %v921
        %923 = vmatmul.bf16.gmra.mxu0 %v522
        %v924 = vpop.f32.mrf.mxu0
        %v925 = vadd.f32 %v371, %v924
        %v926 = vpop.f32.mrf.mxu0
        %v927 = vadd.f32 %v371, %v926
        %928 = vmatmul.bf16.gmra.mxu0 %v523
        %v929 = vpop.f32.mrf.mxu0
        %v930 = vadd.f32 %v371, %v929
        %v931 = vpop.f32.mrf.mxu0
        %v932 = vadd.f32 %v371, %v931
        %933 = vmatmul.bf16.gmra.mxu0 %v524
        %v934 = vpop.f32.mrf.mxu0
        %v935 = vadd.f32 %v371, %v934
        %v936 = vpop.f32.mrf.mxu0
        %v937 = vadd.f32 %v371, %v936
        %938 = vmatmul.bf16.gmra.mxu0 %v525
        %v939 = vpop.f32.mrf.mxu0
        %v940 = vadd.f32 %v371, %v939
        %v941 = vpop.f32.mrf.mxu0
        %v942 = vadd.f32 %v371, %v941
        %943 = vmatmul.bf16.gmra.mxu0 %v526
        %v944 = vpop.f32.mrf.mxu0
        %v945 = vadd.f32 %v371, %v944
        %v946 = vpop.f32.mrf.mxu0
        %v947 = vadd.f32 %v371, %v946
        %948 = vmatmul.bf16.gmra.mxu0 %v527
        %v949 = vpop.f32.mrf.mxu0
        %v950 = vadd.f32 %v371, %v949
        %v951 = vpop.f32.mrf.mxu0
        %v952 = vadd.f32 %v371, %v951
        %953 = vmatmul.bf16.gmra.mxu0 %v528
        %v954 = vpop.f32.mrf.mxu0
        %v955 = vadd.f32 %v371, %v954
        %v956 = vpop.f32.mrf.mxu0
        %v957 = vadd.f32 %v371, %v956
        %958 = vmatmul.bf16.gmra.mxu0 %v529
        %v959 = vpop.f32.mrf.mxu0
        %v960 = vadd.f32 %v371, %v959
        %v961 = vpop.f32.mrf.mxu0
        %v962 = vadd.f32 %v371, %v961
        %963 = vmatmul.bf16.gmra.mxu0 %v530
        %v964 = vpop.f32.mrf.mxu0
        %v965 = vadd.f32 %v371, %v964
        %v966 = vpop.f32.mrf.mxu0
        %v967 = vadd.f32 %v371, %v966
        %968 = vmatmul.bf16.gmra.mxu0 %v531
        %v969 = vpop.f32.mrf.mxu0
        %v970 = vadd.f32 %v371, %v969
        %v971 = vpop.f32.mrf.mxu0
        %v972 = vadd.f32 %v371, %v971
        %973 = vmatmul.bf16.gmra.mxu0 %v532
        %v974 = vpop.f32.mrf.mxu0
        %v975 = vadd.f32 %v371, %v974
        %v976 = vpop.f32.mrf.mxu0
        %v977 = vadd.f32 %v371, %v976
        %978 = vmatmul.bf16.gmra.mxu0 %v533
        %v979 = vpop.f32.mrf.mxu0
        %v980 = vadd.f32 %v371, %v979
        %v981 = vpop.f32.mrf.mxu0
        %v982 = vadd.f32 %v371, %v981
        %983 = vdwg.mxu0
        %v984 = vmax.f32 %v656, 0.0
        %v985 = vmax.f32 %v658, 0.0
        %v986 = vmax.f32 %v661, 0.0
        %v987 = vmax.f32 %v663, 0.0
        %v988 = vmax.f32 %v666, 0.0
        %v989 = vmax.f32 %v668, 0.0
        %v990 = vmax.f32 %v671, 0.0
        %v991 = vmax.f32 %v673, 0.0
        %v992 = vmax.f32 %v676, 0.0
        %v993 = vmax.f32 %v678, 0.0
        %v994 = vmax.f32 %v681, 0.0
        %v995 = vmax.f32 %v683, 0.0
        %v996 = vmax.f32 %v686, 0.0
        %v997 = vmax.f32 %v688, 0.0
        %v998 = vmax.f32 %v691, 0.0
        %v999 = vmax.f32 %v693, 0.0
        %v1000 = vmax.f32 %v696, 0.0
        %v1001 = vmax.f32 %v698, 0.0
        %v1002 = vmax.f32 %v701, 0.0
        %v1003 = vmax.f32 %v703, 0.0
        %v1004 = vmax.f32 %v706, 0.0
        %v1005 = vmax.f32 %v708, 0.0
        %v1006 = vmax.f32 %v711, 0.0
        %v1007 = vmax.f32 %v713, 0.0
        %v1008 = vmax.f32 %v716, 0.0
        %v1009 = vmax.f32 %v718, 0.0
        %v1010 = vmax.f32 %v721, 0.0
        %v1011 = vmax.f32 %v723, 0.0
        %v1012 = vmax.f32 %v726, 0.0
        %v1013 = vmax.f32 %v728, 0.0
        %v1014 = vmax.f32 %v731, 0.0
        %v1015 = vmax.f32 %v733, 0.0
        %v1016 = vmax.f32 %v736, 0.0
        %v1017 = vmax.f32 %v738, 0.0
        %v1018 = vmax.f32 %v741, 0.0
        %v1019 = vmax.f32 %v743, 0.0
        %v1020 = vmax.f32 %v746, 0.0
        %v1021 = vmax.f32 %v748, 0.0
        %v1022 = vmax.f32 %v751, 0.0
        %v1023 = vmax.f32 %v753, 0.0
        %v1024 = vmax.f32 %v756, 0.0
        %v1025 = vmax.f32 %v758, 0.0
        %v1026 = vmax.f32 %v761, 0.0
        %v1027 = vmax.f32 %v763, 0.0
        %v1028 = vmax.f32 %v766, 0.0
        %v1029 = vmax.f32 %v768, 0.0
        %v1030 = vmax.f32 %v771, 0.0
        %v1031 = vmax.f32 %v773, 0.0
        %v1032 = vmax.f32 %v776, 0.0
        %v1033 = vmax.f32 %v778, 0.0
        %v1034 = vmax.f32 %v781, 0.0
        %v1035 = vmax.f32 %v783, 0.0
        %v1036 = vmax.f32 %v786, 0.0
        %v1037 = vmax.f32 %v788, 0.0
        %v1038 = vmax.f32 %v791, 0.0
        %v1039 = vmax.f32 %v793, 0.0
        %v1040 = vmax.f32 %v796, 0.0
        %v1041 = vmax.f32 %v798, 0.0
        %v1042 = vmax.f32 %v801, 0.0
        %v1043 = vmax.f32 %v803, 0.0
        %v1044 = vmax.f32 %v806, 0.0
        %v1045 = vmax.f32 %v808, 0.0
        %v1046 = vmax.f32 %v811, 0.0
        %v1047 = vmax.f32 %v813, 0.0
        %v1048 = vsub.f32 0.0, %v825
        %v1049 = vsub.f32 0.0, %v827
        %v1050 = vsub.f32 0.0, %v830
        %v1051 = vsub.f32 0.0, %v832
        %v1052 = vsub.f32 0.0, %v835
        %v1053 = vsub.f32 0.0, %v837
        %v1054 = vsub.f32 0.0, %v840
        %v1055 = vsub.f32 0.0, %v842
        %v1056 = vsub.f32 0.0, %v845
        %v1057 = vsub.f32 0.0, %v847
        %v1058 = vsub.f32 0.0, %v850
        %v1059 = vsub.f32 0.0, %v852
        %v1060 = vsub.f32 0.0, %v855
        %v1061 = vsub.f32 0.0, %v857
        %v1062 = vsub.f32 0.0, %v860
        %v1063 = vsub.f32 0.0, %v862
        %v1064 = vsub.f32 0.0, %v865
        %v1065 = vsub.f32 0.0, %v867
        %v1066 = vsub.f32 0.0, %v870
        %v1067 = vsub.f32 0.0, %v872
        %v1068 = vsub.f32 0.0, %v875
        %v1069 = vsub.f32 0.0, %v877
        %v1070 = vsub.f32 0.0, %v880
        %v1071 = vsub.f32 0.0, %v882
        %v1072 = vsub.f32 0.0, %v885
        %v1073 = vsub.f32 0.0, %v887
        %v1074 = vsub.f32 0.0, %v890
        %v1075 = vsub.f32 0.0, %v892
        %v1076 = vsub.f32 0.0, %v895
        %v1077 = vsub.f32 0.0, %v897
        %v1078 = vsub.f32 0.0, %v900
        %v1079 = vsub.f32 0.0, %v902
        %v1080 = vsub.f32 0.0, %v905
        %v1081 = vsub.f32 0.0, %v907
        %v1082 = vsub.f32 0.0, %v910
        %v1083 = vsub.f32 0.0, %v912
        %v1084 = vsub.f32 0.0, %v915
        %v1085 = vsub.f32 0.0, %v917
        %v1086 = vsub.f32 0.0, %v920
        %v1087 = vsub.f32 0.0, %v922
        %v1088 = vsub.f32 0.0, %v925
        %v1089 = vsub.f32 0.0, %v927
        %v1090 = vsub.f32 0.0, %v930
        %v1091 = vsub.f32 0.0, %v932
        %v1092 = vsub.f32 0.0, %v935
        %v1093 = vsub.f32 0.0, %v937
        %v1094 = vsub.f32 0.0, %v940
        %v1095 = vsub.f32 0.0, %v942
        %v1096 = vsub.f32 0.0, %v945
        %v1097 = vsub.f32 0.0, %v947
        %v1098 = vsub.f32 0.0, %v950
        %v1099 = vsub.f32 0.0, %v952
        %v1100 = vsub.f32 0.0, %v955
        %v1101 = vsub.f32 0.0, %v957
        %v1102 = vsub.f32 0.0, %v960
        %v1103 = vsub.f32 0.0, %v962
        %v1104 = vsub.f32 0.0, %v965
        %v1105 = vsub.f32 0.0, %v967
        %v1106 = vsub.f32 0.0, %v970
        %v1107 = vsub.f32 0.0, %v972
        %v1108 = vsub.f32 0.0, %v975
        %v1109 = vsub.f32 0.0, %v977
        %v1110 = vsub.f32 0.0, %v980
        %v1111 = vsub.f32 0.0, %v982
        %v1112 = vmul.f32 %v1048, 1.442695
        %v1113 = vpow.pop %v1112
        %v1114 = vmul.f32 %v1049, 1.442695
        %v1115 = vpow.pop %v1114
        %v1116 = vmul.f32 %v1050, 1.442695
        %v1117 = vpow.pop %v1116
        %v1118 = vmul.f32 %v1051, 1.442695
        %v1119 = vpow.pop %v1118
        %v1120 = vmul.f32 %v1052, 1.442695
        %v1121 = vpow.pop %v1120
        %v1122 = vmul.f32 %v1053, 1.442695
        %v1123 = vpow.pop %v1122
        %v1124 = vmul.f32 %v1054, 1.442695
        %v1125 = vpow.pop %v1124
        %v1126 = vmul.f32 %v1055, 1.442695
        %v1127 = vpow.pop %v1126
        %v1128 = vmul.f32 %v1056, 1.442695
        %v1129 = vpow.pop %v1128
        %v1130 = vmul.f32 %v1057, 1.442695
        %v1131 = vpow.pop %v1130
        %v1132 = vmul.f32 %v1058, 1.442695
        %v1133 = vpow.pop %v1132
        %v1134 = vmul.f32 %v1059, 1.442695
        %v1135 = vpow.pop %v1134
        %v1136 = vmul.f32 %v1060, 1.442695
        %v1137 = vpow.pop %v1136
        %v1138 = vmul.f32 %v1061, 1.442695
        %v1139 = vpow.pop %v1138
        %v1140 = vmul.f32 %v1062, 1.442695
        %v1141 = vpow.pop %v1140
        %v1142 = vmul.f32 %v1063, 1.442695
        %v1143 = vpow.pop %v1142
        %v1144 = vmul.f32 %v1064, 1.442695
        %v1145 = vpow.pop %v1144
        %v1146 = vmul.f32 %v1065, 1.442695
        %v1147 = vpow.pop %v1146
        %v1148 = vmul.f32 %v1066, 1.442695
        %v1149 = vpow.pop %v1148
        %v1150 = vmul.f32 %v1067, 1.442695
        %v1151 = vpow.pop %v1150
        %v1152 = vmul.f32 %v1068, 1.442695
        %v1153 = vpow.pop %v1152
        %v1154 = vmul.f32 %v1069, 1.442695
        %v1155 = vpow.pop %v1154
        %v1156 = vmul.f32 %v1070, 1.442695
        %v1157 = vpow.pop %v1156
        %v1158 = vmul.f32 %v1071, 1.442695
        %v1159 = vpow.pop %v1158
        %v1160 = vmul.f32 %v1072, 1.442695
        %v1161 = vpow.pop %v1160
        %v1162 = vmul.f32 %v1073, 1.442695
        %v1163 = vpow.pop %v1162
        %v1164 = vmul.f32 %v1074, 1.442695
        %v1165 = vpow.pop %v1164
        %v1166 = vmul.f32 %v1075, 1.442695
        %v1167 = vpow.pop %v1166
        %v1168 = vmul.f32 %v1076, 1.442695
        %v1169 = vpow.pop %v1168
        %v1170 = vmul.f32 %v1077, 1.442695
        %v1171 = vpow.pop %v1170
        %v1172 = vmul.f32 %v1078, 1.442695
        %v1173 = vpow.pop %v1172
        %v1174 = vmul.f32 %v1079, 1.442695
        %v1175 = vpow.pop %v1174
        %v1176 = vmul.f32 %v1080, 1.442695
        %v1177 = vpow.pop %v1176
        %v1178 = vmul.f32 %v1081, 1.442695
        %v1179 = vpow.pop %v1178
        %v1180 = vmul.f32 %v1082, 1.442695
        %v1181 = vpow.pop %v1180
        %v1182 = vmul.f32 %v1083, 1.442695
        %v1183 = vpow.pop %v1182
        %v1184 = vmul.f32 %v1084, 1.442695
        %v1185 = vpow.pop %v1184
        %v1186 = vmul.f32 %v1085, 1.442695
        %v1187 = vpow.pop %v1186
        %v1188 = vmul.f32 %v1086, 1.442695
        %v1189 = vpow.pop %v1188
        %v1190 = vmul.f32 %v1087, 1.442695
        %v1191 = vpow.pop %v1190
        %v1192 = vmul.f32 %v1088, 1.442695
        %v1193 = vpow.pop %v1192
        %v1194 = vmul.f32 %v1089, 1.442695
        %v1195 = vpow.pop %v1194
        %v1196 = vmul.f32 %v1090, 1.442695
        %v1197 = vpow.pop %v1196
        %v1198 = vmul.f32 %v1091, 1.442695
        %v1199 = vpow.pop %v1198
        %v1200 = vmul.f32 %v1092, 1.442695
        %v1201 = vpow.pop %v1200
        %v1202 = vmul.f32 %v1093, 1.442695
        %v1203 = vpow.pop %v1202
        %v1204 = vmul.f32 %v1094, 1.442695
        %v1205 = vpow.pop %v1204
        %v1206 = vmul.f32 %v1095, 1.442695
        %v1207 = vpow.pop %v1206
        %v1208 = vmul.f32 %v1096, 1.442695
        %v1209 = vpow.pop %v1208
        %v1210 = vmul.f32 %v1097, 1.442695
        %v1211 = vpow.pop %v1210
        %v1212 = vmul.f32 %v1098, 1.442695
        %v1213 = vpow.pop %v1212
        %v1214 = vmul.f32 %v1099, 1.442695
        %v1215 = vpow.pop %v1214
        %v1216 = vmul.f32 %v1100, 1.442695
        %v1217 = vpow.pop %v1216
        %v1218 = vmul.f32 %v1101, 1.442695
        %v1219 = vpow.pop %v1218
        %v1220 = vmul.f32 %v1102, 1.442695
        %v1221 = vpow.pop %v1220
        %v1222 = vmul.f32 %v1103, 1.442695
        %v1223 = vpow.pop %v1222
        %v1224 = vmul.f32 %v1104, 1.442695
        %v1225 = vpow.pop %v1224
        %v1226 = vmul.f32 %v1105, 1.442695
        %v1227 = vpow.pop %v1226
        %v1228 = vmul.f32 %v1106, 1.442695
        %v1229 = vpow.pop %v1228
        %v1230 = vmul.f32 %v1107, 1.442695
        %v1231 = vpow.pop %v1230
        %v1232 = vmul.f32 %v1108, 1.442695
        %v1233 = vpow.pop %v1232
        %v1234 = vmul.f32 %v1109, 1.442695
        %v1235 = vpow.pop %v1234
        %v1236 = vmul.f32 %v1110, 1.442695
        %v1237 = vpow.pop %v1236
        %v1238 = vmul.f32 %v1111, 1.442695
        %v1239 = vpow.pop %v1238
        %v1240 = vadd.f32 %v1113, 1.0
        %v1241 = vadd.f32 %v1115, 1.0
        %v1242 = vadd.f32 %v1117, 1.0
        %v1243 = vadd.f32 %v1119, 1.0
        %v1244 = vadd.f32 %v1121, 1.0
        %v1245 = vadd.f32 %v1123, 1.0
        %v1246 = vadd.f32 %v1125, 1.0
        %v1247 = vadd.f32 %v1127, 1.0
        %v1248 = vadd.f32 %v1129, 1.0
        %v1249 = vadd.f32 %v1131, 1.0
        %v1250 = vadd.f32 %v1133, 1.0
        %v1251 = vadd.f32 %v1135, 1.0
        %v1252 = vadd.f32 %v1137, 1.0
        %v1253 = vadd.f32 %v1139, 1.0
        %v1254 = vadd.f32 %v1141, 1.0
        %v1255 = vadd.f32 %v1143, 1.0
        %v1256 = vadd.f32 %v1145, 1.0
        %v1257 = vadd.f32 %v1147, 1.0
        %v1258 = vadd.f32 %v1149, 1.0
        %v1259 = vadd.f32 %v1151, 1.0
        %v1260 = vadd.f32 %v1153, 1.0
        %v1261 = vadd.f32 %v1155, 1.0
        %v1262 = vadd.f32 %v1157, 1.0
        %v1263 = vadd.f32 %v1159, 1.0
        %v1264 = vadd.f32 %v1161, 1.0
        %v1265 = vadd.f32 %v1163, 1.0
        %v1266 = vadd.f32 %v1165, 1.0
        %v1267 = vadd.f32 %v1167, 1.0
        %v1268 = vadd.f32 %v1169, 1.0
        %v1269 = vadd.f32 %v1171, 1.0
        %v1270 = vadd.f32 %v1173, 1.0
        %v1271 = vadd.f32 %v1175, 1.0
        %v1272 = vadd.f32 %v1177, 1.0
        %v1273 = vadd.f32 %v1179, 1.0
        %v1274 = vadd.f32 %v1181, 1.0
        %v1275 = vadd.f32 %v1183, 1.0
        %v1276 = vadd.f32 %v1185, 1.0
        %v1277 = vadd.f32 %v1187, 1.0
        %v1278 = vadd.f32 %v1189, 1.0
        %v1279 = vadd.f32 %v1191, 1.0
        %v1280 = vadd.f32 %v1193, 1.0
        %v1281 = vadd.f32 %v1195, 1.0
        %v1282 = vadd.f32 %v1197, 1.0
        %v1283 = vadd.f32 %v1199, 1.0
        %v1284 = vadd.f32 %v1201, 1.0
        %v1285 = vadd.f32 %v1203, 1.0
        %v1286 = vadd.f32 %v1205, 1.0
        %v1287 = vadd.f32 %v1207, 1.0
        %v1288 = vadd.f32 %v1209, 1.0
        %v1289 = vadd.f32 %v1211, 1.0
        %v1290 = vadd.f32 %v1213, 1.0
        %v1291 = vadd.f32 %v1215, 1.0
        %v1292 = vadd.f32 %v1217, 1.0
        %v1293 = vadd.f32 %v1219, 1.0
        %v1294 = vadd.f32 %v1221, 1.0
        %v1295 = vadd.f32 %v1223, 1.0
        %v1296 = vadd.f32 %v1225, 1.0
        %v1297 = vadd.f32 %v1227, 1.0
        %v1298 = vadd.f32 %v1229, 1.0
        %v1299 = vadd.f32 %v1231, 1.0
        %v1300 = vadd.f32 %v1233, 1.0
        %v1301 = vadd.f32 %v1235, 1.0
        %v1302 = vadd.f32 %v1237, 1.0
        %v1303 = vadd.f32 %v1239, 1.0
        %v1304 = vrcp.pop %v1240
        %v1305 = vrcp.pop %v1241
        %v1306 = vrcp.pop %v1242
        %v1307 = vrcp.pop %v1243
        %v1308 = vrcp.pop %v1244
        %v1309 = vrcp.pop %v1245
        %v1310 = vrcp.pop %v1246
        %v1311 = vrcp.pop %v1247
        %v1312 = vrcp.pop %v1248
        %v1313 = vrcp.pop %v1249
        %v1314 = vrcp.pop %v1250
        %v1315 = vrcp.pop %v1251
        %v1316 = vrcp.pop %v1252
        %v1317 = vrcp.pop %v1253
        %v1318 = vrcp.pop %v1254
        %v1319 = vrcp.pop %v1255
        %v1320 = vrcp.pop %v1256
        %v1321 = vrcp.pop %v1257
        %v1322 = vrcp.pop %v1258
        %v1323 = vrcp.pop %v1259
        %v1324 = vrcp.pop %v1260
        %v1325 = vrcp.pop %v1261
        %v1326 = vrcp.pop %v1262
        %v1327 = vrcp.pop %v1263
        %v1328 = vrcp.pop %v1264
        %v1329 = vrcp.pop %v1265
        %v1330 = vrcp.pop %v1266
        %v1331 = vrcp.pop %v1267
        %v1332 = vrcp.pop %v1268
        %v1333 = vrcp.pop %v1269
        %v1334 = vrcp.pop %v1270
        %v1335 = vrcp.pop %v1271
        %v1336 = vrcp.pop %v1272
        %v1337 = vrcp.pop %v1273
        %v1338 = vrcp.pop %v1274
        %v1339 = vrcp.pop %v1275
        %v1340 = vrcp.pop %v1276
        %v1341 = vrcp.pop %v1277
        %v1342 = vrcp.pop %v1278
        %v1343 = vrcp.pop %v1279
        %v1344 = vrcp.pop %v1280
        %v1345 = vrcp.pop %v1281
        %v1346 = vrcp.pop %v1282
        %v1347 = vrcp.pop %v1283
        %v1348 = vrcp.pop %v1284
        %v1349 = vrcp.pop %v1285
        %v1350 = vrcp.pop %v1286
        %v1351 = vrcp.pop %v1287
        %v1352 = vrcp.pop %v1288
        %v1353 = vrcp.pop %v1289
        %v1354 = vrcp.pop %v1290
        %v1355 = vrcp.pop %v1291
        %v1356 = vrcp.pop %v1292
        %v1357 = vrcp.pop %v1293
        %v1358 = vrcp.pop %v1294
        %v1359 = vrcp.pop %v1295
        %v1360 = vrcp.pop %v1296
        %v1361 = vrcp.pop %v1297
        %v1362 = vrcp.pop %v1298
        %v1363 = vrcp.pop %v1299
        %v1364 = vrcp.pop %v1300
        %v1365 = vrcp.pop %v1301
        %v1366 = vrcp.pop %v1302
        %v1367 = vrcp.pop %v1303
        %v1368 = vsub.f32 %v984, %v288
        %v1369 = vsub.f32 %v985, %v289
        %v1370 = vsub.f32 %v986, %v290
        %v1371 = vsub.f32 %v987, %v291
        %v1372 = vsub.f32 %v988, %v292
        %v1373 = vsub.f32 %v989, %v293
        %v1374 = vsub.f32 %v990, %v294
        %v1375 = vsub.f32 %v991, %v295
        %v1376 = vsub.f32 %v992, %v296
        %v1377 = vsub.f32 %v993, %v297
        %v1378 = vsub.f32 %v994, %v298
        %v1379 = vsub.f32 %v995, %v299
        %v1380 = vsub.f32 %v996, %v300
        %v1381 = vsub.f32 %v997, %v301
        %v1382 = vsub.f32 %v998, %v302
        %v1383 = vsub.f32 %v999, %v303
        %v1384 = vsub.f32 %v1000, %v304
        %v1385 = vsub.f32 %v1001, %v305
        %v1386 = vsub.f32 %v1002, %v306
        %v1387 = vsub.f32 %v1003, %v307
        %v1388 = vsub.f32 %v1004, %v308
        %v1389 = vsub.f32 %v1005, %v309
        %v1390 = vsub.f32 %v1006, %v310
        %v1391 = vsub.f32 %v1007, %v311
        %v1392 = vsub.f32 %v1008, %v312
        %v1393 = vsub.f32 %v1009, %v313
        %v1394 = vsub.f32 %v1010, %v314
        %v1395 = vsub.f32 %v1011, %v315
        %v1396 = vsub.f32 %v1012, %v316
        %v1397 = vsub.f32 %v1013, %v317
        %v1398 = vsub.f32 %v1014, %v318
        %v1399 = vsub.f32 %v1015, %v319
        %v1400 = vsub.f32 %v1016, %v320
        %v1401 = vsub.f32 %v1017, %v321
        %v1402 = vsub.f32 %v1018, %v322
        %v1403 = vsub.f32 %v1019, %v323
        %v1404 = vsub.f32 %v1020, %v324
        %v1405 = vsub.f32 %v1021, %v325
        %v1406 = vsub.f32 %v1022, %v326
        %v1407 = vsub.f32 %v1023, %v327
        %v1408 = vsub.f32 %v1024, %v328
        %v1409 = vsub.f32 %v1025, %v329
        %v1410 = vsub.f32 %v1026, %v330
        %v1411 = vsub.f32 %v1027, %v331
        %v1412 = vsub.f32 %v1028, %v332
        %v1413 = vsub.f32 %v1029, %v333
        %v1414 = vsub.f32 %v1030, %v334
        %v1415 = vsub.f32 %v1031, %v335
        %v1416 = vsub.f32 %v1032, %v336
        %v1417 = vsub.f32 %v1033, %v337
        %v1418 = vsub.f32 %v1034, %v338
        %v1419 = vsub.f32 %v1035, %v339
        %v1420 = vsub.f32 %v1036, %v340
        %v1421 = vsub.f32 %v1037, %v341
        %v1422 = vsub.f32 %v1038, %v342
        %v1423 = vsub.f32 %v1039, %v343
        %v1424 = vsub.f32 %v1040, %v344
        %v1425 = vsub.f32 %v1041, %v345
        %v1426 = vsub.f32 %v1042, %v346
        %v1427 = vsub.f32 %v1043, %v347
        %v1428 = vsub.f32 %v1044, %v348
        %v1429 = vsub.f32 %v1045, %v349
        %v1430 = vsub.f32 %v1046, %v350
        %v1431 = vsub.f32 %v1047, %v351
        %v1432 = vmul.f32 %v1304, %v1368
        %v1433 = vmul.f32 %v1305, %v1369
        %v1434 = vmul.f32 %v1306, %v1370
        %v1435 = vmul.f32 %v1307, %v1371
        %v1436 = vmul.f32 %v1308, %v1372
        %v1437 = vmul.f32 %v1309, %v1373
        %v1438 = vmul.f32 %v1310, %v1374
        %v1439 = vmul.f32 %v1311, %v1375
        %v1440 = vmul.f32 %v1312, %v1376
        %v1441 = vmul.f32 %v1313, %v1377
        %v1442 = vmul.f32 %v1314, %v1378
        %v1443 = vmul.f32 %v1315, %v1379
        %v1444 = vmul.f32 %v1316, %v1380
        %v1445 = vmul.f32 %v1317, %v1381
        %v1446 = vmul.f32 %v1318, %v1382
        %v1447 = vmul.f32 %v1319, %v1383
        %v1448 = vmul.f32 %v1320, %v1384
        %v1449 = vmul.f32 %v1321, %v1385
        %v1450 = vmul.f32 %v1322, %v1386
        %v1451 = vmul.f32 %v1323, %v1387
        %v1452 = vmul.f32 %v1324, %v1388
        %v1453 = vmul.f32 %v1325, %v1389
        %v1454 = vmul.f32 %v1326, %v1390
        %v1455 = vmul.f32 %v1327, %v1391
        %v1456 = vmul.f32 %v1328, %v1392
        %v1457 = vmul.f32 %v1329, %v1393
        %v1458 = vmul.f32 %v1330, %v1394
        %v1459 = vmul.f32 %v1331, %v1395
        %v1460 = vmul.f32 %v1332, %v1396
        %v1461 = vmul.f32 %v1333, %v1397
        %v1462 = vmul.f32 %v1334, %v1398
        %v1463 = vmul.f32 %v1335, %v1399
        %v1464 = vmul.f32 %v1336, %v1400
        %v1465 = vmul.f32 %v1337, %v1401
        %v1466 = vmul.f32 %v1338, %v1402
        %v1467 = vmul.f32 %v1339, %v1403
        %v1468 = vmul.f32 %v1340, %v1404
        %v1469 = vmul.f32 %v1341, %v1405
        %v1470 = vmul.f32 %v1342, %v1406
        %v1471 = vmul.f32 %v1343, %v1407
        %v1472 = vmul.f32 %v1344, %v1408
        %v1473 = vmul.f32 %v1345, %v1409
        %v1474 = vmul.f32 %v1346, %v1410
        %v1475 = vmul.f32 %v1347, %v1411
        %v1476 = vmul.f32 %v1348, %v1412
        %v1477 = vmul.f32 %v1349, %v1413
        %v1478 = vmul.f32 %v1350, %v1414
        %v1479 = vmul.f32 %v1351, %v1415
        %v1480 = vmul.f32 %v1352, %v1416
        %v1481 = vmul.f32 %v1353, %v1417
        %v1482 = vmul.f32 %v1354, %v1418
        %v1483 = vmul.f32 %v1355, %v1419
        %v1484 = vmul.f32 %v1356, %v1420
        %v1485 = vmul.f32 %v1357, %v1421
        %v1486 = vmul.f32 %v1358, %v1422
        %v1487 = vmul.f32 %v1359, %v1423
        %v1488 = vmul.f32 %v1360, %v1424
        %v1489 = vmul.f32 %v1361, %v1425
        %v1490 = vmul.f32 %v1362, %v1426
        %v1491 = vmul.f32 %v1363, %v1427
        %v1492 = vmul.f32 %v1364, %v1428
        %v1493 = vmul.f32 %v1365, %v1429
        %v1494 = vmul.f32 %v1366, %v1430
        %v1495 = vmul.f32 %v1367, %v1431
        %v1496 = vadd.f32 %v288, %v1432
        %v1497 = vadd.f32 %v289, %v1433
        %v1498 = vadd.f32 %v290, %v1434
        %v1499 = vadd.f32 %v291, %v1435
        %v1500 = vadd.f32 %v292, %v1436
        %v1501 = vadd.f32 %v293, %v1437
        %v1502 = vadd.f32 %v294, %v1438
        %v1503 = vadd.f32 %v295, %v1439
        %v1504 = vadd.f32 %v296, %v1440
        %v1505 = vadd.f32 %v297, %v1441
        %v1506 = vadd.f32 %v298, %v1442
        %v1507 = vadd.f32 %v299, %v1443
        %v1508 = vadd.f32 %v300, %v1444
        %v1509 = vadd.f32 %v301, %v1445
        %v1510 = vadd.f32 %v302, %v1446
        %v1511 = vadd.f32 %v303, %v1447
        %v1512 = vadd.f32 %v304, %v1448
        %v1513 = vadd.f32 %v305, %v1449
        %v1514 = vadd.f32 %v306, %v1450
        %v1515 = vadd.f32 %v307, %v1451
        %v1516 = vadd.f32 %v308, %v1452
        %v1517 = vadd.f32 %v309, %v1453
        %v1518 = vadd.f32 %v310, %v1454
        %v1519 = vadd.f32 %v311, %v1455
        %v1520 = vadd.f32 %v312, %v1456
        %v1521 = vadd.f32 %v313, %v1457
        %v1522 = vadd.f32 %v314, %v1458
        %v1523 = vadd.f32 %v315, %v1459
        %v1524 = vadd.f32 %v316, %v1460
        %v1525 = vadd.f32 %v317, %v1461
        %v1526 = vadd.f32 %v318, %v1462
        %v1527 = vadd.f32 %v319, %v1463
        %v1528 = vadd.f32 %v320, %v1464
        %v1529 = vadd.f32 %v321, %v1465
        %v1530 = vadd.f32 %v322, %v1466
        %v1531 = vadd.f32 %v323, %v1467
        %v1532 = vadd.f32 %v324, %v1468
        %v1533 = vadd.f32 %v325, %v1469
        %v1534 = vadd.f32 %v326, %v1470
        %v1535 = vadd.f32 %v327, %v1471
        %v1536 = vadd.f32 %v328, %v1472
        %v1537 = vadd.f32 %v329, %v1473
        %v1538 = vadd.f32 %v330, %v1474
        %v1539 = vadd.f32 %v331, %v1475
        %v1540 = vadd.f32 %v332, %v1476
        %v1541 = vadd.f32 %v333, %v1477
        %v1542 = vadd.f32 %v334, %v1478
        %v1543 = vadd.f32 %v335, %v1479
        %v1544 = vadd.f32 %v336, %v1480
        %v1545 = vadd.f32 %v337, %v1481
        %v1546 = vadd.f32 %v338, %v1482
        %v1547 = vadd.f32 %v339, %v1483
        %v1548 = vadd.f32 %v340, %v1484
        %v1549 = vadd.f32 %v341, %v1485
        %v1550 = vadd.f32 %v342, %v1486
        %v1551 = vadd.f32 %v343, %v1487
        %v1552 = vadd.f32 %v344, %v1488
        %v1553 = vadd.f32 %v345, %v1489
        %v1554 = vadd.f32 %v346, %v1490
        %v1555 = vadd.f32 %v347, %v1491
        %v1556 = vadd.f32 %v348, %v1492
        %v1557 = vadd.f32 %v349, %v1493
        %v1558 = vadd.f32 %v350, %v1494
        %v1559 = vadd.f32 %v351, %v1495
        %v1560 = vpack.c.bf16 %v1496, %v1496
        %v1561 = vpack.c.bf16 %v1497, %v1497
        %v1562 = vpack.c.bf16 %v1498, %v1498
        %v1563 = vpack.c.bf16 %v1499, %v1499
        %v1564 = vpack.c.bf16 %v1500, %v1500
        %v1565 = vpack.c.bf16 %v1501, %v1501
        %v1566 = vpack.c.bf16 %v1502, %v1502
        %v1567 = vpack.c.bf16 %v1503, %v1503
        %v1568 = vpack.c.bf16 %v1504, %v1504
        %v1569 = vpack.c.bf16 %v1505, %v1505
        %v1570 = vpack.c.bf16 %v1506, %v1506
        %v1571 = vpack.c.bf16 %v1507, %v1507
        %v1572 = vpack.c.bf16 %v1508, %v1508
        %v1573 = vpack.c.bf16 %v1509, %v1509
        %v1574 = vpack.c.bf16 %v1510, %v1510
        %v1575 = vpack.c.bf16 %v1511, %v1511
        %v1576 = vpack.c.bf16 %v1512, %v1512
        %v1577 = vpack.c.bf16 %v1513, %v1513
        %v1578 = vpack.c.bf16 %v1514, %v1514
        %v1579 = vpack.c.bf16 %v1515, %v1515
        %v1580 = vpack.c.bf16 %v1516, %v1516
        %v1581 = vpack.c.bf16 %v1517, %v1517
        %v1582 = vpack.c.bf16 %v1518, %v1518
        %v1583 = vpack.c.bf16 %v1519, %v1519
        %v1584 = vpack.c.bf16 %v1520, %v1520
        %v1585 = vpack.c.bf16 %v1521, %v1521
        %v1586 = vpack.c.bf16 %v1522, %v1522
        %v1587 = vpack.c.bf16 %v1523, %v1523
        %v1588 = vpack.c.bf16 %v1524, %v1524
        %v1589 = vpack.c.bf16 %v1525, %v1525
        %v1590 = vpack.c.bf16 %v1526, %v1526
        %v1591 = vpack.c.bf16 %v1527, %v1527
        %v1592 = vpack.c.bf16 %v1528, %v1528
        %v1593 = vpack.c.bf16 %v1529, %v1529
        %v1594 = vpack.c.bf16 %v1530, %v1530
        %v1595 = vpack.c.bf16 %v1531, %v1531
        %v1596 = vpack.c.bf16 %v1532, %v1532
        %v1597 = vpack.c.bf16 %v1533, %v1533
        %v1598 = vpack.c.bf16 %v1534, %v1534
        %v1599 = vpack.c.bf16 %v1535, %v1535
        %v1600 = vpack.c.bf16 %v1536, %v1536
        %v1601 = vpack.c.bf16 %v1537, %v1537
        %v1602 = vpack.c.bf16 %v1538, %v1538
        %v1603 = vpack.c.bf16 %v1539, %v1539
        %v1604 = vpack.c.bf16 %v1540, %v1540
        %v1605 = vpack.c.bf16 %v1541, %v1541
        %v1606 = vpack.c.bf16 %v1542, %v1542
        %v1607 = vpack.c.bf16 %v1543, %v1543
        %v1608 = vpack.c.bf16 %v1544, %v1544
        %v1609 = vpack.c.bf16 %v1545, %v1545
        %v1610 = vpack.c.bf16 %v1546, %v1546
        %v1611 = vpack.c.bf16 %v1547, %v1547
        %v1612 = vpack.c.bf16 %v1548, %v1548
        %v1613 = vpack.c.bf16 %v1549, %v1549
        %v1614 = vpack.c.bf16 %v1550, %v1550
        %v1615 = vpack.c.bf16 %v1551, %v1551
        %v1616 = vpack.c.bf16 %v1552, %v1552
        %v1617 = vpack.c.bf16 %v1553, %v1553
        %v1618 = vpack.c.bf16 %v1554, %v1554
        %v1619 = vpack.c.bf16 %v1555, %v1555
        %v1620 = vpack.c.bf16 %v1556, %v1556
        %v1621 = vpack.c.bf16 %v1557, %v1557
        %v1622 = vpack.c.bf16 %v1558, %v1558
        %v1623 = vpack.c.bf16 %v1559, %v1559
        %1624 = vst [vmem:[%s221] sm:$0xf] %v1560
        %1625 = vst [vmem:[%s221 + $0x4] sm:$0xf] %v1561
        %1626 = vst [vmem:[%s221 + $0x8] sm:$0xf] %v1562
        %1627 = vst [vmem:[%s221 + $0xc] sm:$0xf] %v1563
        %1628 = vst [vmem:[%s221 + $0x10] sm:$0xf] %v1564
        %1629 = vst [vmem:[%s221 + $0x14] sm:$0xf] %v1565
        %1630 = vst [vmem:[%s221 + $0x18] sm:$0xf] %v1566
        %1631 = vst [vmem:[%s221 + $0x1c] sm:$0xf] %v1567
        %1632 = vst [vmem:[%s221 + $0x20] sm:$0xf] %v1568
        %1633 = vst [vmem:[%s221 + $0x24] sm:$0xf] %v1569
        %1634 = vst [vmem:[%s221 + $0x28] sm:$0xf] %v1570
        %1635 = vst [vmem:[%s221 + $0x2c] sm:$0xf] %v1571
        %1636 = vst [vmem:[%s221 + $0x30] sm:$0xf] %v1572
        %1637 = vst [vmem:[%s221 + $0x34] sm:$0xf] %v1573
        %1638 = vst [vmem:[%s221 + $0x38] sm:$0xf] %v1574
        %1639 = vst [vmem:[%s221 + $0x3c] sm:$0xf] %v1575
        %1640 = vst [vmem:[%s221 + $0x40] sm:$0xf] %v1576
        %1641 = vst [vmem:[%s221 + $0x44] sm:$0xf] %v1577
        %1642 = vst [vmem:[%s221 + $0x48] sm:$0xf] %v1578
        %1643 = vst [vmem:[%s221 + $0x4c] sm:$0xf] %v1579
        %1644 = vst [vmem:[%s221 + $0x50] sm:$0xf] %v1580
        %1645 = vst [vmem:[%s221 + $0x54] sm:$0xf] %v1581
        %1646 = vst [vmem:[%s221 + $0x58] sm:$0xf] %v1582
        %1647 = vst [vmem:[%s221 + $0x5c] sm:$0xf] %v1583
        %1648 = vst [vmem:[%s221 + $0x60] sm:$0xf] %v1584
        %1649 = vst [vmem:[%s221 + $0x64] sm:$0xf] %v1585
        %1650 = vst [vmem:[%s221 + $0x68] sm:$0xf] %v1586
        %1651 = vst [vmem:[%s221 + $0x6c] sm:$0xf] %v1587
        %1652 = vst [vmem:[%s221 + $0x70] sm:$0xf] %v1588
        %1653 = vst [vmem:[%s221 + $0x74] sm:$0xf] %v1589
        %1654 = vst [vmem:[%s221 + $0x78] sm:$0xf] %v1590
        %1655 = vst [vmem:[%s221 + $0x7c] sm:$0xf] %v1591
        %1656 = vst [vmem:[%s221 + $0x80] sm:$0xf] %v1592
        %1657 = vst [vmem:[%s221 + $0x84] sm:$0xf] %v1593
        %1658 = vst [vmem:[%s221 + $0x88] sm:$0xf] %v1594
        %1659 = vst [vmem:[%s221 + $0x8c] sm:$0xf] %v1595
        %1660 = vst [vmem:[%s221 + $0x90] sm:$0xf] %v1596
        %1661 = vst [vmem:[%s221 + $0x94] sm:$0xf] %v1597
        %1662 = vst [vmem:[%s221 + $0x98] sm:$0xf] %v1598
        %1663 = vst [vmem:[%s221 + $0x9c] sm:$0xf] %v1599
        %1664 = vst [vmem:[%s221 + $0xa0] sm:$0xf] %v1600
        %1665 = vst [vmem:[%s221 + $0xa4] sm:$0xf] %v1601
        %1666 = vst [vmem:[%s221 + $0xa8] sm:$0xf] %v1602
        %1667 = vst [vmem:[%s221 + $0xac] sm:$0xf] %v1603
        %1668 = vst [vmem:[%s221 + $0xb0] sm:$0xf] %v1604
        %1669 = vst [vmem:[%s221 + $0xb4] sm:$0xf] %v1605
        %1670 = vst [vmem:[%s221 + $0xb8] sm:$0xf] %v1606
        %1671 = vst [vmem:[%s221 + $0xbc] sm:$0xf] %v1607
        %1672 = vst [vmem:[%s221 + $0xc0] sm:$0xf] %v1608
        %1673 = vst [vmem:[%s221 + $0xc4] sm:$0xf] %v1609
        %1674 = vst [vmem:[%s221 + $0xc8] sm:$0xf] %v1610
        %1675 = vst [vmem:[%s221 + $0xcc] sm:$0xf] %v1611
        %1676 = vst [vmem:[%s221 + $0xd0] sm:$0xf] %v1612
        %1677 = vst [vmem:[%s221 + $0xd4] sm:$0xf] %v1613
        %1678 = vst [vmem:[%s221 + $0xd8] sm:$0xf] %v1614
        %1679 = vst [vmem:[%s221 + $0xdc] sm:$0xf] %v1615
        %1680 = vst [vmem:[%s221 + $0xe0] sm:$0xf] %v1616
        %1681 = vst [vmem:[%s221 + $0xe4] sm:$0xf] %v1617
        %1682 = vst [vmem:[%s221 + $0xe8] sm:$0xf] %v1618
        %1683 = vst [vmem:[%s221 + $0xec] sm:$0xf] %v1619
        %1684 = vst [vmem:[%s221 + $0xf0] sm:$0xf] %v1620
        %1685 = vst [vmem:[%s221 + $0xf4] sm:$0xf] %v1621
        %1686 = vst [vmem:[%s221 + $0xf8] sm:$0xf] %v1622
        %1687 = vst [vmem:[%s221 + $0xfc] sm:$0xf] %v1623
        %s1688 = sand.u32 %s97, 1
        %s1689 = scalar_lea.sflag [#allocation4], %s1688
        %s1690 = sand.u32 %s97, 1
        %s1691 = smul.addr %s1690, 256
        %s1692 = scalar_lea.vmem [#allocation8], %s1691
        // Predicated region
        $region45: #{tpu_custom_call.1} parent=31 // pred_check
          %p1693 = pneg %p107
        $region46: #{tpu_custom_call.1} parent=31 // pred_check_branch
          %1695 = sbr.rel (%p1693) target = $region48
        $region47: #{tpu_custom_call.1} parent=31 // pred_region
          %s1696 = smul.u32 64, %s21
          %1698 = vsyncadd %s1689, 0
          %s1699 = smul.addr %s1696, 4
          %s1700 = scalar_lea.hbm %s3, %s1699
          %s1701 = sshll.u32 %s1692, 4
          %s1702 = int_to_ptr.vmem [resolvable:$true] %s1701
          %s1703 = sshll.u32 %s1700, 4
          %s1704 = int_to_ptr.hbm [resolvable:$true] %s1703
          %1709 = dma.vmem_to_hbm [thread:$0]  %s1702, 4096, %s1704, %s1689, 64, 64, 4
        $region48: #{tpu_custom_call.1} parent=31 // pred_fallthru
          _
      $region32: #{tpu_custom_call.1} parent=5 // pred_fallthru
        _
      %p1710 = scmp.le.s32.totalorder 2, %s16
      // Predicated region
      $region49: #{tpu_custom_call.1} parent=5 // pred_check
        %p1711 = pneg %p1710
      $region50: #{tpu_custom_call.1} parent=5 // pred_check_branch
        %1713 = sbr.rel (%p1711) target = $region52
      $region51: #{tpu_custom_call.1} parent=5 // pred_region
        %s1714 = ssub.s32 %s16, 2
        // Predicated region
        $region53: #{tpu_custom_call.1} parent=51 // pred_check
          %p1715 = pneg %p113
        $region54: #{tpu_custom_call.1} parent=51 // pred_check_branch
          %1717 = sbr.rel (%p1715) target = $region56
        $region55: #{tpu_custom_call.1} parent=51 // pred_region
          %s1718 = sand.u32 %s98, 1
          %s1719 = scalar_lea.sflag [#allocation4], %s1718
          %s1720 = sand.u32 %s98, 1
          %s1721 = smul.addr %s1720, 256
          %s1722 = scalar_lea.vmem [#allocation8], %s1721
          %1724 = dma.done %s1719, 4096
        $region56: #{tpu_custom_call.1} parent=51 // pred_fallthru
          _
      $region52: #{tpu_custom_call.1} parent=5 // pred_fallthru
        _
    $region6: #{tpu_custom_call.1} parent=1 // loop_footer
      %s20 = sadd.s32 1, %s16
    $region7: #{tpu_custom_call.1} parent=1 // loop_footer_branch
      %15 = sbr.rel target = $region3
    $region8: #{tpu_custom_call.1} parent=1 // loop_exit
      _
    %1725 = vsyncpa [#allocation3], 1
    %s1726 = scalar_lea.sflag [#allocation3], 1
    %1727 = vsyncpa %s1726, 1
    %1728 = vsyncpa [#allocation6], 1
    %1729 = vsyncpa [#allocation4], 1
    %s1730 = scalar_lea.sflag [#allocation4], 1
    %1731 = vsyncpa %s1730, 1

</llo_original>
